<compile_context>
chip_gen: v7x
topology: tpu7x:2x2x1
jax: 0.10.0
libtpu: 0.0.40
codegen_flags: <defaults>
</compile_context>

<pallas_src>
import functools

import jax
import jax.numpy as jnp
from jax.experimental import pallas as pl
from jax.experimental.pallas import tpu as pltpu

# ----------------------------- model dims ----------------------------------
INPUT_DIM = 4      # conv in-channels
HIDDEN_DIM = 32    # conv / BN / linear hidden size
OUTPUT_DIM = 8     # linear out features
BATCH = 2          # N  (spatial H = W = 1)

BN_EPS = 1e-5
LRELU_SLOPE = 0.01  # nn.LeakyReLU default negative_slope

# ----------------------------- TPU padding ---------------------------------
M_VALID = BATCH    # valid rows (N * H * W) per forward pass
M_PAD = 8          # pad rows to the f32 8-sublane tile
CIN_PAD = 8        # pad conv-1 in-channels (lhs becomes an aligned 8x8 tile)

# The closed-form BN statistics below are specialized to a 2-row batch; keep the
# padding rows out of the statistics tied to this assert (see review note).
assert M_VALID == 2 and M_VALID <= M_PAD

# Packed parameter panel: (P_ROWS, P_LANES) = (40, 128) f32, lane-dense.
#   rows [ 0,32) lanes [ 0, 32): w2 (32x32)
#   rows [ 0,32) lanes [32, 64): w3 (32x32)
#   rows [ 0,32) lanes [64, 96): w4 (32x32, cols >= OUTPUT_DIM zero)
#   rows [32,40) lanes [ 0, 32): w1 (CIN_PAD x 32, rows >= INPUT_DIM zero)
#   rows [32,40) lanes [32, 64): vec rows = g1, be1, g2, be2, g3, be3, b4, 0
#   everything else zero
P_ROWS = 40
P_LANES = 128

# Matmul precision (see header comment): HIGHEST keeps f32 parity with the
# reference; DEFAULT is faster (1 MXU pass instead of ~6) but not verifiable
# against an f32 reference because of the 2-sample-BN error amplification.
MATMUL_PRECISION = jax.lax.Precision.HIGHEST

_DOT = functools.partial(
    jnp.dot, preferred_element_type=jnp.float32, precision=MATMUL_PRECISION
)


# ------------------------------- kernel -------------------------------------
def _bn_lrelu(h, gamma, beta):
    """Training-mode BatchNorm (batch stats over the M_VALID rows) + LeakyReLU."""
    if M_VALID == 2:
        # Closed form for a 2-sample batch: no cross-sublane tree reduce on the
        # critical path, just two sublane extracts + VPU elementwise.
        h0 = h[0:1, :]
        h1 = h[1:2, :]
        mean = 0.5 * (h0 + h1)
        diff = h0 - h1
        var = 0.25 * diff * diff                      # biased variance
    else:
        # General fallback (static Python branch; never taken for this module).
        hv = h[:M_VALID]
        mean = jnp.mean(hv, axis=0, keepdims=True)
        var = jnp.mean((hv - mean) ** 2, axis=0, keepdims=True)
    scale = gamma * jax.lax.rsqrt(var + BN_EPS)       # rsqrt -> EUP slot
    hn = (h - mean) * scale + beta                    # gamma fused into scale
    return jnp.maximum(hn, LRELU_SLOPE * hn)          # LeakyReLU without select


def discriminator_kernel(x_ref, p_ref, out_ref):
    # x_ref: (M_PAD, CIN_PAD) — one forward pass per grid step (leading grid dim
    # squeezed away by the BlockSpec).  Padded rows are zero on input; they pick
    # up finite garbage after BN but never touch the statistics or the output
    # slice taken by the wrapper.
    x = x_ref[...]

    # Single full-panel load; the constant index_map means this block is DMA'd
    # only once per pallas_call.  Static value slices below are lane/sublane
    # extracts, independent of the activation chain (scheduler hoists them).
    p = p_ref[...]                                    # (40, 128)
    w2 = p[0:HIDDEN_DIM, 0:HIDDEN_DIM]                            # (32, 32)
    w3 = p[0:HIDDEN_DIM, HIDDEN_DIM:2 * HIDDEN_DIM]               # (32, 32)
    w4 = p[0:HIDDEN_DIM, 2 * HIDDEN_DIM:3 * HIDDEN_DIM]           # (32, 32)
    w1 = p[HIDDEN_DIM:HIDDEN_DIM + CIN_PAD, 0:HIDDEN_DIM]         # ( 8, 32)
    vec = p[HIDDEN_DIM:HIDDEN_DIM + 8, HIDDEN_DIM:2 * HIDDEN_DIM] # ( 8, 32)
    g1, be1 = vec[0:1], vec[1:2]
    g2, be2 = vec[2:3], vec[3:4]
    g3, be3 = vec[4:5], vec[5:6]
    b4 = vec[6:7]

    # Pre-BN conv biases b1/b2/b3 are omitted: exactly cancelled by the batch
    # mean subtraction of training-mode BatchNorm (verified against a reference
    # that includes them).  NOT valid for eval-mode BN with running stats.
    h = _bn_lrelu(_DOT(x, w1), g1, be1)
    h = _bn_lrelu(_DOT(h, w2), g2, be2)
    h = _bn_lrelu(_DOT(h, w3), g3, be3)

    # nnSqueeze is shape glue (handled outside); final Linear.  The (8, 32)
    # store is lane-masked — acceptable at this size (see header note).
    out_ref[...] = _DOT(h, w4) + b4


# ------------------------------ wrappers -------------------------------------
def pack_params(params):
    """Pack all weights/BN params into one lane-dense (40, 128) f32 panel."""
    w1p = jnp.zeros((CIN_PAD, HIDDEN_DIM), jnp.float32).at[:INPUT_DIM].set(params["w1"])
    w4p = jnp.zeros((HIDDEN_DIM, HIDDEN_DIM), jnp.float32).at[:, :OUTPUT_DIM].set(params["w4"])
    b4p = jnp.zeros((1, HIDDEN_DIM), jnp.float32).at[:, :OUTPUT_DIM].set(params["b4"])
    vec = jnp.concatenate(
        [params["g1"], params["be1"], params["g2"], params["be2"],
         params["g3"], params["be3"], b4p, jnp.zeros((1, HIDDEN_DIM), jnp.float32)],
        axis=0,
    )                                                              # (8, 32)
    col0 = jnp.concatenate([params["w2"], w1p], axis=0)            # (40, 32)
    col1 = jnp.concatenate([params["w3"], vec], axis=0)            # (40, 32)
    col2 = jnp.concatenate(
        [w4p, jnp.zeros((CIN_PAD, HIDDEN_DIM), jnp.float32)], axis=0)  # (40, 32)
    col3 = jnp.zeros((P_ROWS, HIDDEN_DIM), jnp.float32)            # (40, 32)
    panel = jnp.concatenate([col0, col1, col2, col3], axis=1)      # (40, 128)
    assert panel.shape == (P_ROWS, P_LANES)
    return panel


@jax.jit
def discriminator_forward_batched(x_gnchw, pslab):
    """G independent Discriminator forward passes in ONE pallas_call.

    x_gnchw: (G, N, input_dim, 1, 1) f32  ->  (G, N, output_dim) f32.
    Each grid step computes its own 2-sample BN statistics, so this is exactly
    G applications of the module, with the per-call overhead amortized.
    """
    g, n, cin, hh, ww = x_gnchw.shape
    assert hh == 1 and ww == 1, "nnSqueeze + Linear requires H = W = 1"
    assert n == M_VALID and cin == INPUT_DIM

    # (G, N, C) zero-padded to the native (8, 8) f32 tile per forward pass.
    x2d = x_gnchw.reshape(g, n, cin)
    x_pad = jnp.zeros((g, M_PAD, CIN_PAD), jnp.float32).at[:, :n, :cin].set(x2d)

    cost = pl.CostEstimate(
        flops=g * (2 * M_PAD * (CIN_PAD + 3 * HIDDEN_DIM) * HIDDEN_DIM
                   + 10 * M_PAD * HIDDEN_DIM),
        transcendentals=g * 3 * HIDDEN_DIM,
        bytes_accessed=4 * (g * M_PAD * (CIN_PAD + HIDDEN_DIM) + P_ROWS * P_LANES),
    )

    out_pad = pl.pallas_call(
        discriminator_kernel,
        out_shape=jax.ShapeDtypeStruct((g, M_PAD, HIDDEN_DIM), jnp.float32),
        grid=(g,),
        in_specs=[
            # one forward pass per grid step (leading dim squeezed)
            pl.BlockSpec((None, M_PAD, CIN_PAD), lambda i: (i, 0, 0)),
            # constant index_map -> param panel DMA'd once, resident across steps
            pl.BlockSpec((P_ROWS, P_LANES), lambda i: (0, 0)),
        ],
        out_specs=pl.BlockSpec((None, M_PAD, HIDDEN_DIM), lambda i: (i, 0, 0)),
        compiler_params=pltpu.CompilerParams(
            dimension_semantics=("parallel",),   # shards across v7x's 2 TCs
        ),
        cost_estimate=cost,
    )(x_pad, pslab)

    return out_pad[:, :n, :OUTPUT_DIM]


def discriminator_forward(x_nchw, pslab):
    """Single forward pass: (N, input_dim, 1, 1) -> (N, output_dim)."""
    return discriminator_forward_batched(x_nchw[None], pslab)[0]


# ------------------------- params & reference --------------------------------
def init_params(key):
    """Deterministic synthetic parameters (shapes from the module __init__)."""
    ks = jax.random.split(key, 4)

    def lin_init(k, fan_in, fan_out):
        bound = 1.0 / jnp.sqrt(fan_in)
        kw, kb = jax.random.split(k)
        w = jax.random.uniform(kw, (fan_in, fan_out), jnp.float32, -bound, bound)
        b = jax.random.uniform(kb, (1, fan_out), jnp.float32, -bound, bound)
        return w, b

    w1, b1 = lin_init(ks[0], INPUT_DIM, HIDDEN_DIM)     # Conv2d(in, hid, 1)
    w2, b2 = lin_init(ks[1], HIDDEN_DIM, HIDDEN_DIM)    # Conv2d(hid, hid, 1)
    w3, b3 = lin_init(ks[2], HIDDEN_DIM, HIDDEN_DIM)    # Conv2d(hid, hid, 1)
    w4, b4 = lin_init(ks[3], HIDDEN_DIM, OUTPUT_DIM)    # Linear(hid, out)

    ones = jnp.ones((1, HIDDEN_DIM), jnp.float32)       # BN gamma default
    zeros = jnp.zeros((1, HIDDEN_DIM), jnp.float32)     # BN beta default
    return dict(
        w1=w1, b1=b1, g1=ones, be1=zeros,
        w2=w2, b2=b2, g2=ones, be2=zeros,
        w3=w3, b3=b3, g3=ones, be3=zeros,
        w4=w4, b4=b4,
    )


def reference_forward(x_nchw, params):
    """Plain-JAX reference: Conv(1x1)+bias -> BN (batch stats) -> LeakyReLU, x3,
    then Linear.  Includes the conv biases b1/b2/b3 that the kernel drops, so
    the training-mode-BN cancellation is verified rather than assumed."""
    x = x_nchw.reshape(x_nchw.shape[0], x_nchw.shape[1])

    def bn_lrelu(h, gamma, beta):
        mean = jnp.mean(h, axis=0, keepdims=True)
        var = jnp.mean((h - mean) ** 2, axis=0, keepdims=True)
        hn = (h - mean) * (gamma * jax.lax.rsqrt(var + BN_EPS)) + beta
        return jnp.where(hn >= 0, hn, LRELU_SLOPE * hn)

    h = bn_lrelu(_DOT(x, params["w1"]) + params["b1"], params["g1"], params["be1"])
    h = bn_lrelu(_DOT(h, params["w2"]) + params["b2"], params["g2"], params["be2"])
    h = bn_lrelu(_DOT(h, params["w3"]) + params["b3"], params["g3"], params["be3"])
    return _DOT(h, params["w4"]) + params["b4"]


if __name__ == "__main__":
    key = jax.random.PRNGKey(0)
    kx, kg, kp = jax.random.split(key, 3)

    params = init_params(kp)
    pslab = pack_params(params)   # packed ONCE; reused across calls

    # Tolerance note: with a 2-sample training-mode BN (eps=1e-5) the normalized
    # output amplifies tiny formulation differences (closed-form vs reduce-based
    # variance) by up to ~1/(2*sqrt(eps)); 2e-3 covers that worst case at f32.
    TOL = 2e-3

    # --- single forward pass, module-shaped input (N, C, 1, 1) ---------------
    x = jax.random.normal(kx, (BATCH, INPUT_DIM, 1, 1), jnp.float32)
    out = jax.block_until_ready(discriminator_forward(x, pslab))
    ref = reference_forward(x, params)
    assert out.shape == (BATCH, OUTPUT_DIM)
    assert jnp.allclose(out, ref, atol=TOL, rtol=TOL), float(jnp.max(jnp.abs(out - ref)))

    # --- amortized path: G independent forward passes in ONE pallas_call ------
    G = 8
    xg = jax.random.normal(kg, (G, BATCH, INPUT_DIM, 1, 1), jnp.float32)
    outg = jax.block_until_ready(discriminator_forward_batched(xg, pslab))
    refg = jax.vmap(lambda xe: reference_forward(xe, params))(xg)
    assert outg.shape == (G, BATCH, OUTPUT_DIM)
    assert jnp.allclose(outg, refg, atol=TOL, rtol=TOL), float(jnp.max(jnp.abs(outg - refg)))

    # TODO(synk): BatchNorm running-mean/var side-effect updates (training-time
    # state, not part of the forward output) are not modeled.
    print("KERNEL_OK")
</pallas_src>

<mosaic_0001>
module attributes {stable_mosaic.version = 11 : i64} {
  func.func @discriminator_kernel(%arg0: i32, %arg1: memref<1x8x8xf32, #tpu.memory_space<vmem>>, %arg2: memref<40x128xf32, #tpu.memory_space<vmem>>, %arg3: memref<1x8x32xf32, #tpu.memory_space<vmem>>) attributes {dimension_semantics = [#tpu.dimension_semantics<parallel>], iteration_bounds = array<i64: 1>, scalar_prefetch = 0 : i64, scratch_operands = 0 : i64, tpu.core_type = #tpu.core_type<tc>, window_params = [{transform_indices = @transform_0, window_bounds = array<i64: 1, 8, 8>}, {pipeline_mode = #tpu.pipeline_mode<synchronous>, transform_indices = @transform_1, window_bounds = array<i64: 40, 128>}, {transform_indices = @transform_2, window_bounds = array<i64: 1, 8, 32>}]} {
    %c0 = arith.constant 0 : index
    %c0_0 = arith.constant 0 : index
    %c0_1 = arith.constant 0 : index
    %0 = vector.load %arg1[%c0, %c0_0, %c0_1] : memref<1x8x8xf32, #tpu.memory_space<vmem>>, vector<1x8x8xf32>
    %1 = vector.shape_cast %0 : vector<1x8x8xf32> to vector<8x8xf32>
    %c0_2 = arith.constant 0 : index
    %c0_3 = arith.constant 0 : index
    %2 = vector.load %arg2[%c0_2, %c0_3] : memref<40x128xf32, #tpu.memory_space<vmem>>, vector<40x128xf32>
    %3 = vector.extract_strided_slice %2 {offsets = [0, 0], sizes = [32, 32], strides = [1, 1]} : vector<40x128xf32> to vector<32x32xf32>
    %4 = vector.extract_strided_slice %2 {offsets = [0, 32], sizes = [32, 32], strides = [1, 1]} : vector<40x128xf32> to vector<32x32xf32>
    %5 = vector.extract_strided_slice %2 {offsets = [0, 64], sizes = [32, 32], strides = [1, 1]} : vector<40x128xf32> to vector<32x32xf32>
    %6 = vector.extract_strided_slice %2 {offsets = [32, 0], sizes = [8, 32], strides = [1, 1]} : vector<40x128xf32> to vector<8x32xf32>
    %7 = vector.extract_strided_slice %2 {offsets = [32, 32], sizes = [8, 32], strides = [1, 1]} : vector<40x128xf32> to vector<8x32xf32>
    %8 = vector.extract_strided_slice %7 {offsets = [0, 0], sizes = [1, 32], strides = [1, 1]} : vector<8x32xf32> to vector<1x32xf32>
    %9 = vector.extract_strided_slice %7 {offsets = [1, 0], sizes = [1, 32], strides = [1, 1]} : vector<8x32xf32> to vector<1x32xf32>
    %10 = vector.extract_strided_slice %7 {offsets = [2, 0], sizes = [1, 32], strides = [1, 1]} : vector<8x32xf32> to vector<1x32xf32>
    %11 = vector.extract_strided_slice %7 {offsets = [3, 0], sizes = [1, 32], strides = [1, 1]} : vector<8x32xf32> to vector<1x32xf32>
    %12 = vector.extract_strided_slice %7 {offsets = [4, 0], sizes = [1, 32], strides = [1, 1]} : vector<8x32xf32> to vector<1x32xf32>
    %13 = vector.extract_strided_slice %7 {offsets = [5, 0], sizes = [1, 32], strides = [1, 1]} : vector<8x32xf32> to vector<1x32xf32>
    %14 = vector.extract_strided_slice %7 {offsets = [6, 0], sizes = [1, 32], strides = [1, 1]} : vector<8x32xf32> to vector<1x32xf32>
    %cst = arith.constant dense<0.000000e+00> : vector<8x32xf32>
    %15 = tpu.matmul %1, %6, %cst {dimension_numbers = #tpu.dot_dimension_numbers<[1], [0], [0], [1], [0, 0, 1, 1], [], []>, precision = #tpu.contract_precision<fp32>} : vector<8x8xf32>, vector<8x32xf32>, vector<8x32xf32> -> vector<8x32xf32>
    %16 = vector.extract_strided_slice %15 {offsets = [0, 0], sizes = [1, 32], strides = [1, 1]} : vector<8x32xf32> to vector<1x32xf32>
    %17 = vector.extract_strided_slice %15 {offsets = [1, 0], sizes = [1, 32], strides = [1, 1]} : vector<8x32xf32> to vector<1x32xf32>
    %18 = arith.addf %16, %17 : vector<1x32xf32>
    %cst_4 = arith.constant 5.000000e-01 : f32
    %19 = vector.broadcast %cst_4 : f32 to vector<1x32xf32>
    %20 = arith.mulf %19, %18 : vector<1x32xf32>
    %21 = arith.subf %16, %17 : vector<1x32xf32>
    %cst_5 = arith.constant 2.500000e-01 : f32
    %22 = vector.broadcast %cst_5 : f32 to vector<1x32xf32>
    %23 = arith.mulf %22, %21 : vector<1x32xf32>
    %24 = arith.mulf %23, %21 : vector<1x32xf32>
    %cst_6 = arith.constant 9.99999974E-6 : f32
    %25 = vector.broadcast %cst_6 : f32 to vector<1x32xf32>
    %26 = arith.addf %24, %25 : vector<1x32xf32>
    %27 = math.rsqrt %26 : vector<1x32xf32>
    %28 = arith.mulf %8, %27 : vector<1x32xf32>
    %29 = vector.broadcast %20 : vector<1x32xf32> to vector<8x32xf32>
    %30 = arith.subf %15, %29 : vector<8x32xf32>
    %31 = vector.broadcast %28 : vector<1x32xf32> to vector<8x32xf32>
    %32 = arith.mulf %30, %31 : vector<8x32xf32>
    %33 = vector.broadcast %9 : vector<1x32xf32> to vector<8x32xf32>
    %34 = arith.addf %32, %33 : vector<8x32xf32>
    %cst_7 = arith.constant 0.00999999977 : f32
    %35 = vector.broadcast %cst_7 : f32 to vector<8x32xf32>
    %36 = arith.mulf %35, %34 : vector<8x32xf32>
    %37 = arith.maximumf %34, %36 : vector<8x32xf32>
    %cst_8 = arith.constant dense<0.000000e+00> : vector<8x32xf32>
    %38 = tpu.matmul %37, %3, %cst_8 {dimension_numbers = #tpu.dot_dimension_numbers<[1], [0], [0], [1], [0, 0, 1, 1], [], []>, precision = #tpu.contract_precision<fp32>} : vector<8x32xf32>, vector<32x32xf32>, vector<8x32xf32> -> vector<8x32xf32>
    %39 = vector.extract_strided_slice %38 {offsets = [0, 0], sizes = [1, 32], strides = [1, 1]} : vector<8x32xf32> to vector<1x32xf32>
    %40 = vector.extract_strided_slice %38 {offsets = [1, 0], sizes = [1, 32], strides = [1, 1]} : vector<8x32xf32> to vector<1x32xf32>
    %41 = arith.addf %39, %40 : vector<1x32xf32>
    %cst_9 = arith.constant 5.000000e-01 : f32
    %42 = vector.broadcast %cst_9 : f32 to vector<1x32xf32>
    %43 = arith.mulf %42, %41 : vector<1x32xf32>
    %44 = arith.subf %39, %40 : vector<1x32xf32>
    %cst_10 = arith.constant 2.500000e-01 : f32
    %45 = vector.broadcast %cst_10 : f32 to vector<1x32xf32>
    %46 = arith.mulf %45, %44 : vector<1x32xf32>
    %47 = arith.mulf %46, %44 : vector<1x32xf32>
    %cst_11 = arith.constant 9.99999974E-6 : f32
    %48 = vector.broadcast %cst_11 : f32 to vector<1x32xf32>
    %49 = arith.addf %47, %48 : vector<1x32xf32>
    %50 = math.rsqrt %49 : vector<1x32xf32>
    %51 = arith.mulf %10, %50 : vector<1x32xf32>
    %52 = vector.broadcast %43 : vector<1x32xf32> to vector<8x32xf32>
    %53 = arith.subf %38, %52 : vector<8x32xf32>
    %54 = vector.broadcast %51 : vector<1x32xf32> to vector<8x32xf32>
    %55 = arith.mulf %53, %54 : vector<8x32xf32>
    %56 = vector.broadcast %11 : vector<1x32xf32> to vector<8x32xf32>
    %57 = arith.addf %55, %56 : vector<8x32xf32>
    %cst_12 = arith.constant 0.00999999977 : f32
    %58 = vector.broadcast %cst_12 : f32 to vector<8x32xf32>
    %59 = arith.mulf %58, %57 : vector<8x32xf32>
    %60 = arith.maximumf %57, %59 : vector<8x32xf32>
    %cst_13 = arith.constant dense<0.000000e+00> : vector<8x32xf32>
    %61 = tpu.matmul %60, %4, %cst_13 {dimension_numbers = #tpu.dot_dimension_numbers<[1], [0], [0], [1], [0, 0, 1, 1], [], []>, precision = #tpu.contract_precision<fp32>} : vector<8x32xf32>, vector<32x32xf32>, vector<8x32xf32> -> vector<8x32xf32>
    %62 = vector.extract_strided_slice %61 {offsets = [0, 0], sizes = [1, 32], strides = [1, 1]} : vector<8x32xf32> to vector<1x32xf32>
    %63 = vector.extract_strided_slice %61 {offsets = [1, 0], sizes = [1, 32], strides = [1, 1]} : vector<8x32xf32> to vector<1x32xf32>
    %64 = arith.addf %62, %63 : vector<1x32xf32>
    %cst_14 = arith.constant 5.000000e-01 : f32
    %65 = vector.broadcast %cst_14 : f32 to vector<1x32xf32>
    %66 = arith.mulf %65, %64 : vector<1x32xf32>
    %67 = arith.subf %62, %63 : vector<1x32xf32>
    %cst_15 = arith.constant 2.500000e-01 : f32
    %68 = vector.broadcast %cst_15 : f32 to vector<1x32xf32>
    %69 = arith.mulf %68, %67 : vector<1x32xf32>
    %70 = arith.mulf %69, %67 : vector<1x32xf32>
    %cst_16 = arith.constant 9.99999974E-6 : f32
    %71 = vector.broadcast %cst_16 : f32 to vector<1x32xf32>
    %72 = arith.addf %70, %71 : vector<1x32xf32>
    %73 = math.rsqrt %72 : vector<1x32xf32>
    %74 = arith.mulf %12, %73 : vector<1x32xf32>
    %75 = vector.broadcast %66 : vector<1x32xf32> to vector<8x32xf32>
    %76 = arith.subf %61, %75 : vector<8x32xf32>
    %77 = vector.broadcast %74 : vector<1x32xf32> to vector<8x32xf32>
    %78 = arith.mulf %76, %77 : vector<8x32xf32>
    %79 = vector.broadcast %13 : vector<1x32xf32> to vector<8x32xf32>
    %80 = arith.addf %78, %79 : vector<8x32xf32>
    %cst_17 = arith.constant 0.00999999977 : f32
    %81 = vector.broadcast %cst_17 : f32 to vector<8x32xf32>
    %82 = arith.mulf %81, %80 : vector<8x32xf32>
    %83 = arith.maximumf %80, %82 : vector<8x32xf32>
    %cst_18 = arith.constant dense<0.000000e+00> : vector<8x32xf32>
    %84 = tpu.matmul %83, %5, %cst_18 {dimension_numbers = #tpu.dot_dimension_numbers<[1], [0], [0], [1], [0, 0, 1, 1], [], []>, precision = #tpu.contract_precision<fp32>} : vector<8x32xf32>, vector<32x32xf32>, vector<8x32xf32> -> vector<8x32xf32>
    %85 = vector.broadcast %14 : vector<1x32xf32> to vector<8x32xf32>
    %86 = arith.addf %84, %85 : vector<8x32xf32>
    %c0_19 = arith.constant 0 : index
    %c0_20 = arith.constant 0 : index
    %c0_21 = arith.constant 0 : index
    %87 = vector.load %arg3[%c0_19, %c0_20, %c0_21] : memref<1x8x32xf32, #tpu.memory_space<vmem>>, vector<1x8x32xf32>
    %88 = vector.shape_cast %87 : vector<1x8x32xf32> to vector<8x32xf32>
    %89 = vector.shape_cast %86 : vector<8x32xf32> to vector<1x8x32xf32>
    tpu.vector_store %arg3[%c0_19, %c0_20, %c0_21], %89 {strides = array<i32>} : memref<1x8x32xf32, #tpu.memory_space<vmem>>, vector<1x8x32xf32>,
    return
  }
  func.func @transform_0(%arg0: i32) -> (i32, i32, i32) {
    %c0_i32 = arith.constant 0 : i32
    %c0_i32_0 = arith.constant 0 : i32
    %c0_i32_1 = arith.constant 0 : i32
    return %arg0, %c0_i32, %c0_i32_0 : i32, i32, i32
  }
  func.func @transform_1(%arg0: i32) -> (i32, i32) {
    %c0_i32 = arith.constant 0 : i32
    %c0_i32_0 = arith.constant 0 : i32
    %c0_i32_1 = arith.constant 0 : i32
    return %c0_i32, %c0_i32_0 : i32, i32
  }
  func.func @transform_2(%arg0: i32) -> (i32, i32, i32) {
    %c0_i32 = arith.constant 0 : i32
    %c0_i32_0 = arith.constant 0 : i32
    %c0_i32_1 = arith.constant 0 : i32
    return %arg0, %c0_i32, %c0_i32_0 : i32, i32, i32
  }
}

</mosaic_0001>

<llo_original>
// kernel: discriminator_forward_batched.1
$region0: #{discriminator_forward_batched.1}
  #allocation0 [shape = 'u32[]', space=smem, size = 0x4, offset = 0x4, fixed_abs, tag = 'smem constant byte address 0x4 - core index']
  #allocation1 [shape = 'u32[144,128]{1,0:T(1,128)}', space=vmem, size = 0x12000, scoped, tag = 'internal scratch']
  %s0 = inlined_call_operand.vmem [shape: f32[1,8,8], index: 0, kind: input, shape index: {}]
  %s1 = inlined_call_operand.hbm [shape: f32[40,128], index: 1, kind: input, shape index: {}]
  %s2 = inlined_call_operand.vmem [shape: f32[1,8,32], index: 2, kind: output, shape index: {}]
  %s3 = sld [smem:[#allocation0]]
  $region22: #{discriminator_forward_batched.1} parent=0
    _
  %s5 = ssub.s32 1, %s3
  %s6 = scalar_select 0, %s5, %s3
  $region1: #{discriminator_forward_batched.1} parent=0
    #allocation2 [shape = 'u8[20480]{0}', space=vmem, size = 0x5000, scoped, tag = 'input window, operand 1, single buffered']
    #allocation3 [shape = 's32[1]{0}', space=sflag, size = 0x4, scoped, tag = 'scoped memory for discriminator_forward_batched.1']
    %7 = vsyncpa [#allocation3], 0
    // Predicated region
    $region2: #{discriminator_forward_batched.1} parent=1 // pred_check
      _
    $region3: #{discriminator_forward_batched.1} parent=1 // pred_check_branch
      %9 = sbr.rel (0) target = $region5
    $region4: #{discriminator_forward_batched.1} parent=1 // pred_region
      _
    $region5: #{discriminator_forward_batched.1} parent=1 // pred_fallthru
      _
    // Predicated region
    $region6: #{discriminator_forward_batched.1} parent=1 // pred_check
      _
    $region7: #{discriminator_forward_batched.1} parent=1 // pred_check_branch
      %11 = sbr.rel (0) target = $region9
    $region8: #{discriminator_forward_batched.1} parent=1 // pred_region
      %s13 = ssub.s32 640, 640
      %14 = vsyncadd [#allocation3], %s13
      %s15 = sshll.u32 [#allocation2], 4
      %s16 = int_to_ptr.vmem [resolvable:$true] %s15
      %21 = dma.hbm_to_vmem [thread:$0]  %s1, 640, %s16, [#allocation3], 128, 128, 8
    $region9: #{discriminator_forward_batched.1} parent=1 // pred_fallthru
      _
    // Predicated region
    $region10: #{discriminator_forward_batched.1} parent=1 // pred_check
      _
    $region11: #{discriminator_forward_batched.1} parent=1 // pred_check_branch
      %23 = sbr.rel (0) target = $region13
    $region12: #{discriminator_forward_batched.1} parent=1 // pred_region
      %24 = dma.done [#allocation3], 640
    $region13: #{discriminator_forward_batched.1} parent=1 // pred_fallthru
      _
    %v25 = vld [vmem:[%s0] sm:$0xff]
    %v26 = vld [vmem:[#allocation2] sm:$0xff]
    %v27 = vld [vmem:[#allocation2 + $0x8] sm:$0xff]
    %v28 = vld [vmem:[#allocation2 + $0x10] sm:$0xff]
    %v29 = vld [vmem:[#allocation2 + $0x18] sm:$0xff]
    %v30 = vld [vmem:[#allocation2 + $0x20] sm:$0xff]
    %vm31 = vcmask 64512
    %v33 = vsel %vm31, %v25, 0
    %35 = vmatprep.subr.mxu0 0.0
    %v36 = vand.u32 %v30, 4294901760
    %37 = vmatpush1.msra.mxu0 %v36
    %38 = vmatprep.subr.mxu0 0.0
    %39 = vmatpush1.msra.mxu0 0.0
    %40 = vmatprep.subr.mxu0 0.0
    %41 = vmatpush1.msra.mxu0 0.0
    %42 = vmatprep.subr.mxu0 0.0
    %43 = vmatpush1.msra.mxu0 0.0
    %44 = vmatprep.subr.mxu0 0.0
    %45 = vmatpush1.msra.mxu0 0.0
    %46 = vmatprep.subr.mxu0 0.0
    %47 = vmatpush1.msra.mxu0 0.0
    %48 = vmatprep.subr.mxu0 0.0
    %49 = vmatpush1.msra.mxu0 0.0
    %50 = vmatprep.subr.mxu0 0.0
    %51 = vmatpush1.msra.mxu0 0.0
    %52 = vmatprep.subr.mxu0 0.0
    %53 = vmatpush1.msra.mxu0 0.0
    %54 = vmatprep.subr.mxu0 0.0
    %55 = vmatpush1.msra.mxu0 0.0
    %56 = vmatprep.subr.mxu0 0.0
    %57 = vmatpush1.msra.mxu0 0.0
    %58 = vmatprep.subr.mxu0 0.0
    %59 = vmatpush1.msra.mxu0 0.0
    %60 = vmatprep.subr.mxu0 0.0
    %61 = vmatpush1.msra.mxu0 0.0
    %62 = vmatprep.subr.mxu0 0.0
    %63 = vmatpush1.msra.mxu0 0.0
    %64 = vmatprep.subr.mxu0 0.0
    %65 = vmatpush1.msra.mxu0 0.0
    %66 = vmatprep.subr.mxu0 0.0
    %67 = vmatpush1.msra.mxu0 0.0
    %68 = vmatprep.subr.mxu0 0.0
    %69 = vmatpush1.msra.mxu0 0.0
    %70 = vmatprep.subr.mxu0 0.0
    %71 = vmatpush1.msra.mxu0 0.0
    %72 = vmatprep.subr.mxu0 0.0
    %73 = vmatpush1.msra.mxu0 0.0
    %74 = vmatprep.subr.mxu0 0.0
    %75 = vmatpush1.msra.mxu0 0.0
    %76 = vmatprep.subr.mxu0 0.0
    %77 = vmatpush1.msra.mxu0 0.0
    %78 = vmatprep.subr.mxu0 0.0
    %79 = vmatpush1.msra.mxu0 0.0
    %80 = vmatprep.subr.mxu0 0.0
    %81 = vmatpush1.msra.mxu0 0.0
    %82 = vmatprep.subr.mxu0 0.0
    %83 = vmatpush1.msra.mxu0 0.0
    %84 = vmatprep.subr.mxu0 0.0
    %85 = vmatpush1.msra.mxu0 0.0
    %86 = vmatprep.subr.mxu0 0.0
    %87 = vmatpush1.msra.mxu0 0.0
    %88 = vmatprep.subr.mxu0 0.0
    %89 = vmatpush1.msra.mxu0 0.0
    %90 = vmatprep.subr.mxu0 0.0
    %91 = vmatpush1.msra.mxu0 0.0
    %92 = vmatprep.subr.mxu0 0.0
    %93 = vmatpush1.msra.mxu0 0.0
    %94 = vmatprep.subr.mxu0 0.0
    %95 = vmatpush1.msra.mxu0 0.0
    %96 = vmatprep.subr.mxu0 0.0
    %97 = vmatpush1.msra.mxu0 0.0
    %98 = vmatprep.subr.mxu0 0.0
    %99 = vmatpush1.msra.mxu0 0.0
    %100 = vmatprep.mubr.f32.mxu0 0.0
    %v101 = vand.u32 %v33, 4294901760
    %v102 = vsub.f32 %v33, %v101
    %v103 = vand.u32 %v102, 4294901760
    %v104 = vsub.f32 %v102, %v103
    %v105 = vand.u32 %v104, 4294901760
    %106 = vmatmul.mubr.f32.gmra.mrb[0].mxu0 %v105
    %v107 = vpop.f32.mrb[0].mxu0
    %v108 = vadd.f32 0.0, %v107
    %v109 = vpop.f32.mrb[0].mxu0
    %110 = vdwg.mxu0
    %111 = vmatprep.subr.mxu0 0.0
    %v112 = vand.u32 %v30, 4294901760
    %v113 = vsub.f32 %v30, %v112
    %v114 = vand.u32 %v113, 4294901760
    %v115 = vsub.f32 %v113, %v114
    %v116 = vand.u32 %v115, 4294901760
    %117 = vmatpush1.msra.mxu0 %v116
    %118 = vmatprep.subr.mxu0 0.0
    %119 = vmatpush1.msra.mxu0 0.0
    %120 = vmatprep.subr.mxu0 0.0
    %121 = vmatpush1.msra.mxu0 0.0
    %122 = vmatprep.subr.mxu0 0.0
    %123 = vmatpush1.msra.mxu0 0.0
    %124 = vmatprep.subr.mxu0 0.0
    %125 = vmatpush1.msra.mxu0 0.0
    %126 = vmatprep.subr.mxu0 0.0
    %127 = vmatpush1.msra.mxu0 0.0
    %128 = vmatprep.subr.mxu0 0.0
    %129 = vmatpush1.msra.mxu0 0.0
    %130 = vmatprep.subr.mxu0 0.0
    %131 = vmatpush1.msra.mxu0 0.0
    %132 = vmatprep.subr.mxu0 0.0
    %133 = vmatpush1.msra.mxu0 0.0
    %134 = vmatprep.subr.mxu0 0.0
    %135 = vmatpush1.msra.mxu0 0.0
    %136 = vmatprep.subr.mxu0 0.0
    %137 = vmatpush1.msra.mxu0 0.0
    %138 = vmatprep.subr.mxu0 0.0
    %139 = vmatpush1.msra.mxu0 0.0
    %140 = vmatprep.subr.mxu0 0.0
    %141 = vmatpush1.msra.mxu0 0.0
    %142 = vmatprep.subr.mxu0 0.0
    %143 = vmatpush1.msra.mxu0 0.0
    %144 = vmatprep.subr.mxu0 0.0
    %145 = vmatpush1.msra.mxu0 0.0
    %146 = vmatprep.subr.mxu0 0.0
    %147 = vmatpush1.msra.mxu0 0.0
    %148 = vmatprep.subr.mxu0 0.0
    %149 = vmatpush1.msra.mxu0 0.0
    %150 = vmatprep.subr.mxu0 0.0
    %151 = vmatpush1.msra.mxu0 0.0
    %152 = vmatprep.subr.mxu0 0.0
    %153 = vmatpush1.msra.mxu0 0.0
    %154 = vmatprep.subr.mxu0 0.0
    %155 = vmatpush1.msra.mxu0 0.0
    %156 = vmatprep.subr.mxu0 0.0
    %157 = vmatpush1.msra.mxu0 0.0
    %158 = vmatprep.subr.mxu0 0.0
    %159 = vmatpush1.msra.mxu0 0.0
    %160 = vmatprep.subr.mxu0 0.0
    %161 = vmatpush1.msra.mxu0 0.0
    %162 = vmatprep.subr.mxu0 0.0
    %163 = vmatpush1.msra.mxu0 0.0
    %164 = vmatprep.subr.mxu0 0.0
    %165 = vmatpush1.msra.mxu0 0.0
    %166 = vmatprep.subr.mxu0 0.0
    %167 = vmatpush1.msra.mxu0 0.0
    %168 = vmatprep.subr.mxu0 0.0
    %169 = vmatpush1.msra.mxu0 0.0
    %170 = vmatprep.subr.mxu0 0.0
    %171 = vmatpush1.msra.mxu0 0.0
    %172 = vmatprep.subr.mxu0 0.0
    %173 = vmatpush1.msra.mxu0 0.0
    %174 = vmatprep.subr.mxu0 0.0
    %175 = vmatpush1.msra.mxu0 0.0
    %176 = vmatprep.subr.mxu0 0.0
    %177 = vmatpush1.msra.mxu0 0.0
    %178 = vmatprep.subr.mxu0 0.0
    %179 = vmatpush1.msra.mxu0 0.0
    %180 = vmatprep.mubr.f32.mxu0 0.0
    %v181 = vand.u32 %v33, 4294901760
    %182 = vmatmul.mubr.f32.gmra.mrb[0].mxu0 %v181
    %v183 = vpop.f32.mrb[0].mxu0
    %v184 = vadd.f32 %v108, %v183
    %v185 = vpop.f32.mrb[0].mxu0
    %186 = vdwg.mxu0
    %187 = vmatprep.subr.mxu0 0.0
    %v188 = vand.u32 %v30, 4294901760
    %v189 = vsub.f32 %v30, %v188
    %190 = vmatpush1.msra.mxu0 %v189
    %191 = vmatprep.subr.mxu0 0.0
    %192 = vmatpush1.msra.mxu0 0.0
    %193 = vmatprep.subr.mxu0 0.0
    %194 = vmatpush1.msra.mxu0 0.0
    %195 = vmatprep.subr.mxu0 0.0
    %196 = vmatpush1.msra.mxu0 0.0
    %197 = vmatprep.subr.mxu0 0.0
    %198 = vmatpush1.msra.mxu0 0.0
    %199 = vmatprep.subr.mxu0 0.0
    %200 = vmatpush1.msra.mxu0 0.0
    %201 = vmatprep.subr.mxu0 0.0
    %202 = vmatpush1.msra.mxu0 0.0
    %203 = vmatprep.subr.mxu0 0.0
    %204 = vmatpush1.msra.mxu0 0.0
    %205 = vmatprep.subr.mxu0 0.0
    %206 = vmatpush1.msra.mxu0 0.0
    %207 = vmatprep.subr.mxu0 0.0
    %208 = vmatpush1.msra.mxu0 0.0
    %209 = vmatprep.subr.mxu0 0.0
    %210 = vmatpush1.msra.mxu0 0.0
    %211 = vmatprep.subr.mxu0 0.0
    %212 = vmatpush1.msra.mxu0 0.0
    %213 = vmatprep.subr.mxu0 0.0
    %214 = vmatpush1.msra.mxu0 0.0
    %215 = vmatprep.subr.mxu0 0.0
    %216 = vmatpush1.msra.mxu0 0.0
    %217 = vmatprep.subr.mxu0 0.0
    %218 = vmatpush1.msra.mxu0 0.0
    %219 = vmatprep.subr.mxu0 0.0
    %220 = vmatpush1.msra.mxu0 0.0
    %221 = vmatprep.subr.mxu0 0.0
    %222 = vmatpush1.msra.mxu0 0.0
    %223 = vmatprep.subr.mxu0 0.0
    %224 = vmatpush1.msra.mxu0 0.0
    %225 = vmatprep.subr.mxu0 0.0
    %226 = vmatpush1.msra.mxu0 0.0
    %227 = vmatprep.subr.mxu0 0.0
    %228 = vmatpush1.msra.mxu0 0.0
    %229 = vmatprep.subr.mxu0 0.0
    %230 = vmatpush1.msra.mxu0 0.0
    %231 = vmatprep.subr.mxu0 0.0
    %232 = vmatpush1.msra.mxu0 0.0
    %233 = vmatprep.subr.mxu0 0.0
    %234 = vmatpush1.msra.mxu0 0.0
    %235 = vmatprep.subr.mxu0 0.0
    %236 = vmatpush1.msra.mxu0 0.0
    %237 = vmatprep.subr.mxu0 0.0
    %238 = vmatpush1.msra.mxu0 0.0
    %239 = vmatprep.subr.mxu0 0.0
    %240 = vmatpush1.msra.mxu0 0.0
    %241 = vmatprep.subr.mxu0 0.0
    %242 = vmatpush1.msra.mxu0 0.0
    %243 = vmatprep.subr.mxu0 0.0
    %244 = vmatpush1.msra.mxu0 0.0
    %245 = vmatprep.subr.mxu0 0.0
    %246 = vmatpush1.msra.mxu0 0.0
    %247 = vmatprep.subr.mxu0 0.0
    %248 = vmatpush1.msra.mxu0 0.0
    %249 = vmatprep.subr.mxu0 0.0
    %250 = vmatpush1.msra.mxu0 0.0
    %251 = vmatprep.subr.mxu0 0.0
    %252 = vmatpush1.msra.mxu0 0.0
    %253 = vmatprep.mubr.f32.mxu0 0.0
    %v254 = vand.u32 %v33, 4294901760
    %v255 = vsub.f32 %v33, %v254
    %256 = vmatmul.mubr.f32.gmra.mrb[0].mxu0 %v255
    %v257 = vpop.f32.mrb[0].mxu0
    %v258 = vadd.f32 %v184, %v257
    %v259 = vpop.f32.mrb[0].mxu0
    %260 = vdwg.mxu0
    %261 = vmatprep.subr.mxu0 0.0
    %v262 = vand.u32 %v30, 4294901760
    %263 = vmatpush1.msra.mxu0 %v262
    %264 = vmatprep.subr.mxu0 0.0
    %265 = vmatpush1.msra.mxu0 0.0
    %266 = vmatprep.subr.mxu0 0.0
    %267 = vmatpush1.msra.mxu0 0.0
    %268 = vmatprep.subr.mxu0 0.0
    %269 = vmatpush1.msra.mxu0 0.0
    %270 = vmatprep.subr.mxu0 0.0
    %271 = vmatpush1.msra.mxu0 0.0
    %272 = vmatprep.subr.mxu0 0.0
    %273 = vmatpush1.msra.mxu0 0.0
    %274 = vmatprep.subr.mxu0 0.0
    %275 = vmatpush1.msra.mxu0 0.0
    %276 = vmatprep.subr.mxu0 0.0
    %277 = vmatpush1.msra.mxu0 0.0
    %278 = vmatprep.subr.mxu0 0.0
    %279 = vmatpush1.msra.mxu0 0.0
    %280 = vmatprep.subr.mxu0 0.0
    %281 = vmatpush1.msra.mxu0 0.0
    %282 = vmatprep.subr.mxu0 0.0
    %283 = vmatpush1.msra.mxu0 0.0
    %284 = vmatprep.subr.mxu0 0.0
    %285 = vmatpush1.msra.mxu0 0.0
    %286 = vmatprep.subr.mxu0 0.0
    %287 = vmatpush1.msra.mxu0 0.0
    %288 = vmatprep.subr.mxu0 0.0
    %289 = vmatpush1.msra.mxu0 0.0
    %290 = vmatprep.subr.mxu0 0.0
    %291 = vmatpush1.msra.mxu0 0.0
    %292 = vmatprep.subr.mxu0 0.0
    %293 = vmatpush1.msra.mxu0 0.0
    %294 = vmatprep.subr.mxu0 0.0
    %295 = vmatpush1.msra.mxu0 0.0
    %296 = vmatprep.subr.mxu0 0.0
    %297 = vmatpush1.msra.mxu0 0.0
    %298 = vmatprep.subr.mxu0 0.0
    %299 = vmatpush1.msra.mxu0 0.0
    %300 = vmatprep.subr.mxu0 0.0
    %301 = vmatpush1.msra.mxu0 0.0
    %302 = vmatprep.subr.mxu0 0.0
    %303 = vmatpush1.msra.mxu0 0.0
    %304 = vmatprep.subr.mxu0 0.0
    %305 = vmatpush1.msra.mxu0 0.0
    %306 = vmatprep.subr.mxu0 0.0
    %307 = vmatpush1.msra.mxu0 0.0
    %308 = vmatprep.subr.mxu0 0.0
    %309 = vmatpush1.msra.mxu0 0.0
    %310 = vmatprep.subr.mxu0 0.0
    %311 = vmatpush1.msra.mxu0 0.0
    %312 = vmatprep.subr.mxu0 0.0
    %313 = vmatpush1.msra.mxu0 0.0
    %314 = vmatprep.subr.mxu0 0.0
    %315 = vmatpush1.msra.mxu0 0.0
    %316 = vmatprep.subr.mxu0 0.0
    %317 = vmatpush1.msra.mxu0 0.0
    %318 = vmatprep.subr.mxu0 0.0
    %319 = vmatpush1.msra.mxu0 0.0
    %320 = vmatprep.subr.mxu0 0.0
    %321 = vmatpush1.msra.mxu0 0.0
    %322 = vmatprep.subr.mxu0 0.0
    %323 = vmatpush1.msra.mxu0 0.0
    %324 = vmatprep.subr.mxu0 0.0
    %325 = vmatpush1.msra.mxu0 0.0
    %326 = vmatprep.mubr.f32.mxu0 0.0
    %v327 = vand.u32 %v33, 4294901760
    %v328 = vsub.f32 %v33, %v327
    %v329 = vand.u32 %v328, 4294901760
    %330 = vmatmul.mubr.f32.gmra.mrb[0].mxu0 %v329
    %v331 = vpop.f32.mrb[0].mxu0
    %v332 = vadd.f32 %v258, %v331
    %v333 = vpop.f32.mrb[0].mxu0
    %334 = vdwg.mxu0
    %335 = vmatprep.subr.mxu0 0.0
    %v336 = vand.u32 %v30, 4294901760
    %v337 = vsub.f32 %v30, %v336
    %v338 = vand.u32 %v337, 4294901760
    %339 = vmatpush1.msra.mxu0 %v338
    %340 = vmatprep.subr.mxu0 0.0
    %341 = vmatpush1.msra.mxu0 0.0
    %342 = vmatprep.subr.mxu0 0.0
    %343 = vmatpush1.msra.mxu0 0.0
    %344 = vmatprep.subr.mxu0 0.0
    %345 = vmatpush1.msra.mxu0 0.0
    %346 = vmatprep.subr.mxu0 0.0
    %347 = vmatpush1.msra.mxu0 0.0
    %348 = vmatprep.subr.mxu0 0.0
    %349 = vmatpush1.msra.mxu0 0.0
    %350 = vmatprep.subr.mxu0 0.0
    %351 = vmatpush1.msra.mxu0 0.0
    %352 = vmatprep.subr.mxu0 0.0
    %353 = vmatpush1.msra.mxu0 0.0
    %354 = vmatprep.subr.mxu0 0.0
    %355 = vmatpush1.msra.mxu0 0.0
    %356 = vmatprep.subr.mxu0 0.0
    %357 = vmatpush1.msra.mxu0 0.0
    %358 = vmatprep.subr.mxu0 0.0
    %359 = vmatpush1.msra.mxu0 0.0
    %360 = vmatprep.subr.mxu0 0.0
    %361 = vmatpush1.msra.mxu0 0.0
    %362 = vmatprep.subr.mxu0 0.0
    %363 = vmatpush1.msra.mxu0 0.0
    %364 = vmatprep.subr.mxu0 0.0
    %365 = vmatpush1.msra.mxu0 0.0
    %366 = vmatprep.subr.mxu0 0.0
    %367 = vmatpush1.msra.mxu0 0.0
    %368 = vmatprep.subr.mxu0 0.0
    %369 = vmatpush1.msra.mxu0 0.0
    %370 = vmatprep.subr.mxu0 0.0
    %371 = vmatpush1.msra.mxu0 0.0
    %372 = vmatprep.subr.mxu0 0.0
    %373 = vmatpush1.msra.mxu0 0.0
    %374 = vmatprep.subr.mxu0 0.0
    %375 = vmatpush1.msra.mxu0 0.0
    %376 = vmatprep.subr.mxu0 0.0
    %377 = vmatpush1.msra.mxu0 0.0
    %378 = vmatprep.subr.mxu0 0.0
    %379 = vmatpush1.msra.mxu0 0.0
    %380 = vmatprep.subr.mxu0 0.0
    %381 = vmatpush1.msra.mxu0 0.0
    %382 = vmatprep.subr.mxu0 0.0
    %383 = vmatpush1.msra.mxu0 0.0
    %384 = vmatprep.subr.mxu0 0.0
    %385 = vmatpush1.msra.mxu0 0.0
    %386 = vmatprep.subr.mxu0 0.0
    %387 = vmatpush1.msra.mxu0 0.0
    %388 = vmatprep.subr.mxu0 0.0
    %389 = vmatpush1.msra.mxu0 0.0
    %390 = vmatprep.subr.mxu0 0.0
    %391 = vmatpush1.msra.mxu0 0.0
    %392 = vmatprep.subr.mxu0 0.0
    %393 = vmatpush1.msra.mxu0 0.0
    %394 = vmatprep.subr.mxu0 0.0
    %395 = vmatpush1.msra.mxu0 0.0
    %396 = vmatprep.subr.mxu0 0.0
    %397 = vmatpush1.msra.mxu0 0.0
    %398 = vmatprep.subr.mxu0 0.0
    %399 = vmatpush1.msra.mxu0 0.0
    %400 = vmatprep.subr.mxu0 0.0
    %401 = vmatpush1.msra.mxu0 0.0
    %402 = vmatprep.mubr.f32.mxu0 0.0
    %v403 = vand.u32 %v33, 4294901760
    %404 = vmatmul.mubr.f32.gmra.mrb[0].mxu0 %v403
    %v405 = vpop.f32.mrb[0].mxu0
    %v406 = vadd.f32 %v332, %v405
    %v407 = vpop.f32.mrb[0].mxu0
    %408 = vdwg.mxu0
    %409 = vmatprep.subr.mxu0 0.0
    %v410 = vand.u32 %v30, 4294901760
    %411 = vmatpush1.msra.mxu0 %v410
    %412 = vmatprep.subr.mxu0 0.0
    %413 = vmatpush1.msra.mxu0 0.0
    %414 = vmatprep.subr.mxu0 0.0
    %415 = vmatpush1.msra.mxu0 0.0
    %416 = vmatprep.subr.mxu0 0.0
    %417 = vmatpush1.msra.mxu0 0.0
    %418 = vmatprep.subr.mxu0 0.0
    %419 = vmatpush1.msra.mxu0 0.0
    %420 = vmatprep.subr.mxu0 0.0
    %421 = vmatpush1.msra.mxu0 0.0
    %422 = vmatprep.subr.mxu0 0.0
    %423 = vmatpush1.msra.mxu0 0.0
    %424 = vmatprep.subr.mxu0 0.0
    %425 = vmatpush1.msra.mxu0 0.0
    %426 = vmatprep.subr.mxu0 0.0
    %427 = vmatpush1.msra.mxu0 0.0
    %428 = vmatprep.subr.mxu0 0.0
    %429 = vmatpush1.msra.mxu0 0.0
    %430 = vmatprep.subr.mxu0 0.0
    %431 = vmatpush1.msra.mxu0 0.0
    %432 = vmatprep.subr.mxu0 0.0
    %433 = vmatpush1.msra.mxu0 0.0
    %434 = vmatprep.subr.mxu0 0.0
    %435 = vmatpush1.msra.mxu0 0.0
    %436 = vmatprep.subr.mxu0 0.0
    %437 = vmatpush1.msra.mxu0 0.0
    %438 = vmatprep.subr.mxu0 0.0
    %439 = vmatpush1.msra.mxu0 0.0
    %440 = vmatprep.subr.mxu0 0.0
    %441 = vmatpush1.msra.mxu0 0.0
    %442 = vmatprep.subr.mxu0 0.0
    %443 = vmatpush1.msra.mxu0 0.0
    %444 = vmatprep.subr.mxu0 0.0
    %445 = vmatpush1.msra.mxu0 0.0
    %446 = vmatprep.subr.mxu0 0.0
    %447 = vmatpush1.msra.mxu0 0.0
    %448 = vmatprep.subr.mxu0 0.0
    %449 = vmatpush1.msra.mxu0 0.0
    %450 = vmatprep.subr.mxu0 0.0
    %451 = vmatpush1.msra.mxu0 0.0
    %452 = vmatprep.subr.mxu0 0.0
    %453 = vmatpush1.msra.mxu0 0.0
    %454 = vmatprep.subr.mxu0 0.0
    %455 = vmatpush1.msra.mxu0 0.0
    %456 = vmatprep.subr.mxu0 0.0
    %457 = vmatpush1.msra.mxu0 0.0
    %458 = vmatprep.subr.mxu0 0.0
    %459 = vmatpush1.msra.mxu0 0.0
    %460 = vmatprep.subr.mxu0 0.0
    %461 = vmatpush1.msra.mxu0 0.0
    %462 = vmatprep.subr.mxu0 0.0
    %463 = vmatpush1.msra.mxu0 0.0
    %464 = vmatprep.subr.mxu0 0.0
    %465 = vmatpush1.msra.mxu0 0.0
    %466 = vmatprep.subr.mxu0 0.0
    %467 = vmatpush1.msra.mxu0 0.0
    %468 = vmatprep.subr.mxu0 0.0
    %469 = vmatpush1.msra.mxu0 0.0
    %470 = vmatprep.subr.mxu0 0.0
    %471 = vmatpush1.msra.mxu0 0.0
    %472 = vmatprep.subr.mxu0 0.0
    %473 = vmatpush1.msra.mxu0 0.0
    %474 = vmatprep.mubr.f32.mxu0 0.0
    %v475 = vand.u32 %v33, 4294901760
    %476 = vmatmul.mubr.f32.gmra.mrb[0].mxu0 %v475
    %v477 = vpop.f32.mrb[0].mxu0
    %v478 = vadd.f32 %v406, %v477
    %v479 = vpop.f32.mrb[0].mxu0
    %480 = vdwg.mxu0
    %v482 = vrot.slane %v478, 1
    %v484 = vadd.f32 %v478, %v482
    %v485 = vmul.f32 %v484, 0.5
    %v486 = vsub.f32 %v478, %v482
    %v487 = vmul.f32 %v486, 0.25
    %v488 = vmul.f32 %v487, %v486
    %v489 = vadd.f32 %v488, 1e-05
    %v490 = vrsqrt.pop %v489
    %492 = vrot.lane.b32.xlu0 %v490, 32
    %v493 = vpop.permute.xlu0 %492
    %v495 = vmul.f32 %v30, %v493
    %v496 = vlaneseq
    %v497 = vshrl.u32 %v496, 7
    %v498 = vsub.s32 0, %v497
    %v499 = vrot.slane %v485, %v498
    %v500 = vsub.f32 %v478, %v499
    %v501 = vlaneseq
    %v502 = vshrl.u32 %v501, 7
    %v503 = vsub.s32 0, %v502
    %v504 = vrot.slane %v495, %v503
    %506 = vrot.lane.b32.xlu0 %v504, 96
    %v507 = vpop.permute.xlu0 %506
    %v509 = vmul.f32 %v500, %v507
    %v510 = vlaneseq
    %v511 = vshrl.u32 %v510, 7
    %v512 = vsub.s32 1, %v511
    %v513 = vrot.slane %v30, %v512
    %515 = vrot.lane.b32.xlu0 %v513, 96
    %v516 = vpop.permute.xlu0 %515
    %v518 = vadd.f32 %v509, %v516
    %v519 = vmul.f32 %v518, 0.01
    %v520 = vmax.f32 %v518, %v519
    %vm521 = vcmask 261120
    %v523 = vsel %vm521, %v520, 0
    %525 = vmatprep.subr.mxu0 0.0
    %v526 = vand.u32 %v26, 4294901760
    %527 = vmatpush1.msra.mxu0 %v526
    %528 = vmatprep.subr.mxu0 0.0
    %v529 = vand.u32 %v27, 4294901760
    %530 = vmatpush1.msra.mxu0 %v529
    %531 = vmatprep.subr.mxu0 0.0
    %v532 = vand.u32 %v28, 4294901760
    %533 = vmatpush1.msra.mxu0 %v532
    %534 = vmatprep.subr.mxu0 0.0
    %v535 = vand.u32 %v29, 4294901760
    %536 = vmatpush1.msra.mxu0 %v535
    %537 = vmatprep.subr.mxu0 0.0
    %538 = vmatpush1.msra.mxu0 0.0
    %539 = vmatprep.subr.mxu0 0.0
    %540 = vmatpush1.msra.mxu0 0.0
    %541 = vmatprep.subr.mxu0 0.0
    %542 = vmatpush1.msra.mxu0 0.0
    %543 = vmatprep.subr.mxu0 0.0
    %544 = vmatpush1.msra.mxu0 0.0
    %545 = vmatprep.subr.mxu0 0.0
    %546 = vmatpush1.msra.mxu0 0.0
    %547 = vmatprep.subr.mxu0 0.0
    %548 = vmatpush1.msra.mxu0 0.0
    %549 = vmatprep.subr.mxu0 0.0
    %550 = vmatpush1.msra.mxu0 0.0
    %551 = vmatprep.subr.mxu0 0.0
    %552 = vmatpush1.msra.mxu0 0.0
    %553 = vmatprep.subr.mxu0 0.0
    %554 = vmatpush1.msra.mxu0 0.0
    %555 = vmatprep.subr.mxu0 0.0
    %556 = vmatpush1.msra.mxu0 0.0
    %557 = vmatprep.subr.mxu0 0.0
    %558 = vmatpush1.msra.mxu0 0.0
    %559 = vmatprep.subr.mxu0 0.0
    %560 = vmatpush1.msra.mxu0 0.0
    %561 = vmatprep.subr.mxu0 0.0
    %562 = vmatpush1.msra.mxu0 0.0
    %563 = vmatprep.subr.mxu0 0.0
    %564 = vmatpush1.msra.mxu0 0.0
    %565 = vmatprep.subr.mxu0 0.0
    %566 = vmatpush1.msra.mxu0 0.0
    %567 = vmatprep.subr.mxu0 0.0
    %568 = vmatpush1.msra.mxu0 0.0
    %569 = vmatprep.subr.mxu0 0.0
    %570 = vmatpush1.msra.mxu0 0.0
    %571 = vmatprep.subr.mxu0 0.0
    %572 = vmatpush1.msra.mxu0 0.0
    %573 = vmatprep.subr.mxu0 0.0
    %574 = vmatpush1.msra.mxu0 0.0
    %575 = vmatprep.subr.mxu0 0.0
    %576 = vmatpush1.msra.mxu0 0.0
    %577 = vmatprep.subr.mxu0 0.0
    %578 = vmatpush1.msra.mxu0 0.0
    %579 = vmatprep.subr.mxu0 0.0
    %580 = vmatpush1.msra.mxu0 0.0
    %581 = vmatprep.subr.mxu0 0.0
    %582 = vmatpush1.msra.mxu0 0.0
    %583 = vmatprep.subr.mxu0 0.0
    %584 = vmatpush1.msra.mxu0 0.0
    %585 = vmatprep.subr.mxu0 0.0
    %586 = vmatpush1.msra.mxu0 0.0
    %587 = vmatprep.subr.mxu0 0.0
    %588 = vmatpush1.msra.mxu0 0.0
    %589 = vmatprep.subr.mxu0 0.0
    %590 = vmatpush1.msra.mxu0 0.0
    %591 = vmatprep.subr.mxu0 0.0
    %592 = vmatpush1.msra.mxu0 0.0
    %593 = vmatprep.mubr.f32.mxu0 0.0
    %v594 = vand.u32 %v523, 4294901760
    %v595 = vsub.f32 %v523, %v594
    %v596 = vand.u32 %v595, 4294901760
    %v597 = vsub.f32 %v595, %v596
    %v598 = vand.u32 %v597, 4294901760
    %599 = vmatmul.mubr.f32.gmra.mrb[0].mxu0 %v598
    %v600 = vpop.f32.mrb[0].mxu0
    %v601 = vadd.f32 0.0, %v600
    %v602 = vpop.f32.mrb[0].mxu0
    %603 = vdwg.mxu0
    %604 = vmatprep.subr.mxu0 0.0
    %v605 = vand.u32 %v26, 4294901760
    %v606 = vsub.f32 %v26, %v605
    %v607 = vand.u32 %v606, 4294901760
    %v608 = vsub.f32 %v606, %v607
    %v609 = vand.u32 %v608, 4294901760
    %610 = vmatpush1.msra.mxu0 %v609
    %611 = vmatprep.subr.mxu0 0.0
    %v612 = vand.u32 %v27, 4294901760
    %v613 = vsub.f32 %v27, %v612
    %v614 = vand.u32 %v613, 4294901760
    %v615 = vsub.f32 %v613, %v614
    %v616 = vand.u32 %v615, 4294901760
    %617 = vmatpush1.msra.mxu0 %v616
    %618 = vmatprep.subr.mxu0 0.0
    %v619 = vand.u32 %v28, 4294901760
    %v620 = vsub.f32 %v28, %v619
    %v621 = vand.u32 %v620, 4294901760
    %v622 = vsub.f32 %v620, %v621
    %v623 = vand.u32 %v622, 4294901760
    %624 = vmatpush1.msra.mxu0 %v623
    %625 = vmatprep.subr.mxu0 0.0
    %v626 = vand.u32 %v29, 4294901760
    %v627 = vsub.f32 %v29, %v626
    %v628 = vand.u32 %v627, 4294901760
    %v629 = vsub.f32 %v627, %v628
    %v630 = vand.u32 %v629, 4294901760
    %631 = vmatpush1.msra.mxu0 %v630
    %632 = vmatprep.subr.mxu0 0.0
    %633 = vmatpush1.msra.mxu0 0.0
    %634 = vmatprep.subr.mxu0 0.0
    %635 = vmatpush1.msra.mxu0 0.0
    %636 = vmatprep.subr.mxu0 0.0
    %637 = vmatpush1.msra.mxu0 0.0
    %638 = vmatprep.subr.mxu0 0.0
    %639 = vmatpush1.msra.mxu0 0.0
    %640 = vmatprep.subr.mxu0 0.0
    %641 = vmatpush1.msra.mxu0 0.0
    %642 = vmatprep.subr.mxu0 0.0
    %643 = vmatpush1.msra.mxu0 0.0
    %644 = vmatprep.subr.mxu0 0.0
    %645 = vmatpush1.msra.mxu0 0.0
    %646 = vmatprep.subr.mxu0 0.0
    %647 = vmatpush1.msra.mxu0 0.0
    %648 = vmatprep.subr.mxu0 0.0
    %649 = vmatpush1.msra.mxu0 0.0
    %650 = vmatprep.subr.mxu0 0.0
    %651 = vmatpush1.msra.mxu0 0.0
    %652 = vmatprep.subr.mxu0 0.0
    %653 = vmatpush1.msra.mxu0 0.0
    %654 = vmatprep.subr.mxu0 0.0
    %655 = vmatpush1.msra.mxu0 0.0
    %656 = vmatprep.subr.mxu0 0.0
    %657 = vmatpush1.msra.mxu0 0.0
    %658 = vmatprep.subr.mxu0 0.0
    %659 = vmatpush1.msra.mxu0 0.0
    %660 = vmatprep.subr.mxu0 0.0
    %661 = vmatpush1.msra.mxu0 0.0
    %662 = vmatprep.subr.mxu0 0.0
    %663 = vmatpush1.msra.mxu0 0.0
    %664 = vmatprep.subr.mxu0 0.0
    %665 = vmatpush1.msra.mxu0 0.0
    %666 = vmatprep.subr.mxu0 0.0
    %667 = vmatpush1.msra.mxu0 0.0
    %668 = vmatprep.subr.mxu0 0.0
    %669 = vmatpush1.msra.mxu0 0.0
    %670 = vmatprep.subr.mxu0 0.0
    %671 = vmatpush1.msra.mxu0 0.0
    %672 = vmatprep.subr.mxu0 0.0
    %673 = vmatpush1.msra.mxu0 0.0
    %674 = vmatprep.subr.mxu0 0.0
    %675 = vmatpush1.msra.mxu0 0.0
    %676 = vmatprep.subr.mxu0 0.0
    %677 = vmatpush1.msra.mxu0 0.0
    %678 = vmatprep.subr.mxu0 0.0
    %679 = vmatpush1.msra.mxu0 0.0
    %680 = vmatprep.subr.mxu0 0.0
    %681 = vmatpush1.msra.mxu0 0.0
    %682 = vmatprep.subr.mxu0 0.0
    %683 = vmatpush1.msra.mxu0 0.0
    %684 = vmatprep.subr.mxu0 0.0
    %685 = vmatpush1.msra.mxu0 0.0
    %686 = vmatprep.subr.mxu0 0.0
    %687 = vmatpush1.msra.mxu0 0.0
    %688 = vmatprep.mubr.f32.mxu0 0.0
    %v689 = vand.u32 %v523, 4294901760
    %690 = vmatmul.mubr.f32.gmra.mrb[0].mxu0 %v689
    %v691 = vpop.f32.mrb[0].mxu0
    %v692 = vadd.f32 %v601, %v691
    %v693 = vpop.f32.mrb[0].mxu0
    %694 = vdwg.mxu0
    %695 = vmatprep.subr.mxu0 0.0
    %v696 = vand.u32 %v26, 4294901760
    %v697 = vsub.f32 %v26, %v696
    %698 = vmatpush1.msra.mxu0 %v697
    %699 = vmatprep.subr.mxu0 0.0
    %v700 = vand.u32 %v27, 4294901760
    %v701 = vsub.f32 %v27, %v700
    %702 = vmatpush1.msra.mxu0 %v701
    %703 = vmatprep.subr.mxu0 0.0
    %v704 = vand.u32 %v28, 4294901760
    %v705 = vsub.f32 %v28, %v704
    %706 = vmatpush1.msra.mxu0 %v705
    %707 = vmatprep.subr.mxu0 0.0
    %v708 = vand.u32 %v29, 4294901760
    %v709 = vsub.f32 %v29, %v708
    %710 = vmatpush1.msra.mxu0 %v709
    %711 = vmatprep.subr.mxu0 0.0
    %712 = vmatpush1.msra.mxu0 0.0
    %713 = vmatprep.subr.mxu0 0.0
    %714 = vmatpush1.msra.mxu0 0.0
    %715 = vmatprep.subr.mxu0 0.0
    %716 = vmatpush1.msra.mxu0 0.0
    %717 = vmatprep.subr.mxu0 0.0
    %718 = vmatpush1.msra.mxu0 0.0
    %719 = vmatprep.subr.mxu0 0.0
    %720 = vmatpush1.msra.mxu0 0.0
    %721 = vmatprep.subr.mxu0 0.0
    %722 = vmatpush1.msra.mxu0 0.0
    %723 = vmatprep.subr.mxu0 0.0
    %724 = vmatpush1.msra.mxu0 0.0
    %725 = vmatprep.subr.mxu0 0.0
    %726 = vmatpush1.msra.mxu0 0.0
    %727 = vmatprep.subr.mxu0 0.0
    %728 = vmatpush1.msra.mxu0 0.0
    %729 = vmatprep.subr.mxu0 0.0
    %730 = vmatpush1.msra.mxu0 0.0
    %731 = vmatprep.subr.mxu0 0.0
    %732 = vmatpush1.msra.mxu0 0.0
    %733 = vmatprep.subr.mxu0 0.0
    %734 = vmatpush1.msra.mxu0 0.0
    %735 = vmatprep.subr.mxu0 0.0
    %736 = vmatpush1.msra.mxu0 0.0
    %737 = vmatprep.subr.mxu0 0.0
    %738 = vmatpush1.msra.mxu0 0.0
    %739 = vmatprep.subr.mxu0 0.0
    %740 = vmatpush1.msra.mxu0 0.0
    %741 = vmatprep.subr.mxu0 0.0
    %742 = vmatpush1.msra.mxu0 0.0
    %743 = vmatprep.subr.mxu0 0.0
    %744 = vmatpush1.msra.mxu0 0.0
    %745 = vmatprep.subr.mxu0 0.0
    %746 = vmatpush1.msra.mxu0 0.0
    %747 = vmatprep.subr.mxu0 0.0
    %748 = vmatpush1.msra.mxu0 0.0
    %749 = vmatprep.subr.mxu0 0.0
    %750 = vmatpush1.msra.mxu0 0.0
    %751 = vmatprep.subr.mxu0 0.0
    %752 = vmatpush1.msra.mxu0 0.0
    %753 = vmatprep.subr.mxu0 0.0
    %754 = vmatpush1.msra.mxu0 0.0
    %755 = vmatprep.subr.mxu0 0.0
    %756 = vmatpush1.msra.mxu0 0.0
    %757 = vmatprep.subr.mxu0 0.0
    %758 = vmatpush1.msra.mxu0 0.0
    %759 = vmatprep.subr.mxu0 0.0
    %760 = vmatpush1.msra.mxu0 0.0
    %761 = vmatprep.subr.mxu0 0.0
    %762 = vmatpush1.msra.mxu0 0.0
    %763 = vmatprep.subr.mxu0 0.0
    %764 = vmatpush1.msra.mxu0 0.0
    %765 = vmatprep.subr.mxu0 0.0
    %766 = vmatpush1.msra.mxu0 0.0
    %767 = vmatprep.mubr.f32.mxu0 0.0
    %v768 = vand.u32 %v523, 4294901760
    %v769 = vsub.f32 %v523, %v768
    %770 = vmatmul.mubr.f32.gmra.mrb[0].mxu0 %v769
    %v771 = vpop.f32.mrb[0].mxu0
    %v772 = vadd.f32 %v692, %v771
    %v773 = vpop.f32.mrb[0].mxu0
    %774 = vdwg.mxu0
    %775 = vmatprep.subr.mxu0 0.0
    %v776 = vand.u32 %v26, 4294901760
    %777 = vmatpush1.msra.mxu0 %v776
    %778 = vmatprep.subr.mxu0 0.0
    %v779 = vand.u32 %v27, 4294901760
    %780 = vmatpush1.msra.mxu0 %v779
    %781 = vmatprep.subr.mxu0 0.0
    %v782 = vand.u32 %v28, 4294901760
    %783 = vmatpush1.msra.mxu0 %v782
    %784 = vmatprep.subr.mxu0 0.0
    %v785 = vand.u32 %v29, 4294901760
    %786 = vmatpush1.msra.mxu0 %v785
    %787 = vmatprep.subr.mxu0 0.0
    %788 = vmatpush1.msra.mxu0 0.0
    %789 = vmatprep.subr.mxu0 0.0
    %790 = vmatpush1.msra.mxu0 0.0
    %791 = vmatprep.subr.mxu0 0.0
    %792 = vmatpush1.msra.mxu0 0.0
    %793 = vmatprep.subr.mxu0 0.0
    %794 = vmatpush1.msra.mxu0 0.0
    %795 = vmatprep.subr.mxu0 0.0
    %796 = vmatpush1.msra.mxu0 0.0
    %797 = vmatprep.subr.mxu0 0.0
    %798 = vmatpush1.msra.mxu0 0.0
    %799 = vmatprep.subr.mxu0 0.0
    %800 = vmatpush1.msra.mxu0 0.0
    %801 = vmatprep.subr.mxu0 0.0
    %802 = vmatpush1.msra.mxu0 0.0
    %803 = vmatprep.subr.mxu0 0.0
    %804 = vmatpush1.msra.mxu0 0.0
    %805 = vmatprep.subr.mxu0 0.0
    %806 = vmatpush1.msra.mxu0 0.0
    %807 = vmatprep.subr.mxu0 0.0
    %808 = vmatpush1.msra.mxu0 0.0
    %809 = vmatprep.subr.mxu0 0.0
    %810 = vmatpush1.msra.mxu0 0.0
    %811 = vmatprep.subr.mxu0 0.0
    %812 = vmatpush1.msra.mxu0 0.0
    %813 = vmatprep.subr.mxu0 0.0
    %814 = vmatpush1.msra.mxu0 0.0
    %815 = vmatprep.subr.mxu0 0.0
    %816 = vmatpush1.msra.mxu0 0.0
    %817 = vmatprep.subr.mxu0 0.0
    %818 = vmatpush1.msra.mxu0 0.0
    %819 = vmatprep.subr.mxu0 0.0
    %820 = vmatpush1.msra.mxu0 0.0
    %821 = vmatprep.subr.mxu0 0.0
    %822 = vmatpush1.msra.mxu0 0.0
    %823 = vmatprep.subr.mxu0 0.0
    %824 = vmatpush1.msra.mxu0 0.0
    %825 = vmatprep.subr.mxu0 0.0
    %826 = vmatpush1.msra.mxu0 0.0
    %827 = vmatprep.subr.mxu0 0.0
    %828 = vmatpush1.msra.mxu0 0.0
    %829 = vmatprep.subr.mxu0 0.0
    %830 = vmatpush1.msra.mxu0 0.0
    %831 = vmatprep.subr.mxu0 0.0
    %832 = vmatpush1.msra.mxu0 0.0
    %833 = vmatprep.subr.mxu0 0.0
    %834 = vmatpush1.msra.mxu0 0.0
    %835 = vmatprep.subr.mxu0 0.0
    %836 = vmatpush1.msra.mxu0 0.0
    %837 = vmatprep.subr.mxu0 0.0
    %838 = vmatpush1.msra.mxu0 0.0
    %839 = vmatprep.subr.mxu0 0.0
    %840 = vmatpush1.msra.mxu0 0.0
    %841 = vmatprep.subr.mxu0 0.0
    %842 = vmatpush1.msra.mxu0 0.0
    %843 = vmatprep.mubr.f32.mxu0 0.0
    %v844 = vand.u32 %v523, 4294901760
    %v845 = vsub.f32 %v523, %v844
    %v846 = vand.u32 %v845, 4294901760
    %847 = vmatmul.mubr.f32.gmra.mrb[0].mxu0 %v846
    %v848 = vpop.f32.mrb[0].mxu0
    %v849 = vadd.f32 %v772, %v848
    %v850 = vpop.f32.mrb[0].mxu0
    %851 = vdwg.mxu0
    %852 = vmatprep.subr.mxu0 0.0
    %v853 = vand.u32 %v26, 4294901760
    %v854 = vsub.f32 %v26, %v853
    %v855 = vand.u32 %v854, 4294901760
    %856 = vmatpush1.msra.mxu0 %v855
    %857 = vmatprep.subr.mxu0 0.0
    %v858 = vand.u32 %v27, 4294901760
    %v859 = vsub.f32 %v27, %v858
    %v860 = vand.u32 %v859, 4294901760
    %861 = vmatpush1.msra.mxu0 %v860
    %862 = vmatprep.subr.mxu0 0.0
    %v863 = vand.u32 %v28, 4294901760
    %v864 = vsub.f32 %v28, %v863
    %v865 = vand.u32 %v864, 4294901760
    %866 = vmatpush1.msra.mxu0 %v865
    %867 = vmatprep.subr.mxu0 0.0
    %v868 = vand.u32 %v29, 4294901760
    %v869 = vsub.f32 %v29, %v868
    %v870 = vand.u32 %v869, 4294901760
    %871 = vmatpush1.msra.mxu0 %v870
    %872 = vmatprep.subr.mxu0 0.0
    %873 = vmatpush1.msra.mxu0 0.0
    %874 = vmatprep.subr.mxu0 0.0
    %875 = vmatpush1.msra.mxu0 0.0
    %876 = vmatprep.subr.mxu0 0.0
    %877 = vmatpush1.msra.mxu0 0.0
    %878 = vmatprep.subr.mxu0 0.0
    %879 = vmatpush1.msra.mxu0 0.0
    %880 = vmatprep.subr.mxu0 0.0
    %881 = vmatpush1.msra.mxu0 0.0
    %882 = vmatprep.subr.mxu0 0.0
    %883 = vmatpush1.msra.mxu0 0.0
    %884 = vmatprep.subr.mxu0 0.0
    %885 = vmatpush1.msra.mxu0 0.0
    %886 = vmatprep.subr.mxu0 0.0
    %887 = vmatpush1.msra.mxu0 0.0
    %888 = vmatprep.subr.mxu0 0.0
    %889 = vmatpush1.msra.mxu0 0.0
    %890 = vmatprep.subr.mxu0 0.0
    %891 = vmatpush1.msra.mxu0 0.0
    %892 = vmatprep.subr.mxu0 0.0
    %893 = vmatpush1.msra.mxu0 0.0
    %894 = vmatprep.subr.mxu0 0.0
    %895 = vmatpush1.msra.mxu0 0.0
    %896 = vmatprep.subr.mxu0 0.0
    %897 = vmatpush1.msra.mxu0 0.0
    %898 = vmatprep.subr.mxu0 0.0
    %899 = vmatpush1.msra.mxu0 0.0
    %900 = vmatprep.subr.mxu0 0.0
    %901 = vmatpush1.msra.mxu0 0.0
    %902 = vmatprep.subr.mxu0 0.0
    %903 = vmatpush1.msra.mxu0 0.0
    %904 = vmatprep.subr.mxu0 0.0
    %905 = vmatpush1.msra.mxu0 0.0
    %906 = vmatprep.subr.mxu0 0.0
    %907 = vmatpush1.msra.mxu0 0.0
    %908 = vmatprep.subr.mxu0 0.0
    %909 = vmatpush1.msra.mxu0 0.0
    %910 = vmatprep.subr.mxu0 0.0
    %911 = vmatpush1.msra.mxu0 0.0
    %912 = vmatprep.subr.mxu0 0.0
    %913 = vmatpush1.msra.mxu0 0.0
    %914 = vmatprep.subr.mxu0 0.0
    %915 = vmatpush1.msra.mxu0 0.0
    %916 = vmatprep.subr.mxu0 0.0
    %917 = vmatpush1.msra.mxu0 0.0
    %918 = vmatprep.subr.mxu0 0.0
    %919 = vmatpush1.msra.mxu0 0.0
    %920 = vmatprep.subr.mxu0 0.0
    %921 = vmatpush1.msra.mxu0 0.0
    %922 = vmatprep.subr.mxu0 0.0
    %923 = vmatpush1.msra.mxu0 0.0
    %924 = vmatprep.subr.mxu0 0.0
    %925 = vmatpush1.msra.mxu0 0.0
    %926 = vmatprep.subr.mxu0 0.0
    %927 = vmatpush1.msra.mxu0 0.0
    %928 = vmatprep.mubr.f32.mxu0 0.0
    %v929 = vand.u32 %v523, 4294901760
    %930 = vmatmul.mubr.f32.gmra.mrb[0].mxu0 %v929
    %v931 = vpop.f32.mrb[0].mxu0
    %v932 = vadd.f32 %v849, %v931
    %v933 = vpop.f32.mrb[0].mxu0
    %934 = vdwg.mxu0
    %935 = vmatprep.subr.mxu0 0.0
    %v936 = vand.u32 %v26, 4294901760
    %937 = vmatpush1.msra.mxu0 %v936
    %938 = vmatprep.subr.mxu0 0.0
    %v939 = vand.u32 %v27, 4294901760
    %940 = vmatpush1.msra.mxu0 %v939
    %941 = vmatprep.subr.mxu0 0.0
    %v942 = vand.u32 %v28, 4294901760
    %943 = vmatpush1.msra.mxu0 %v942
    %944 = vmatprep.subr.mxu0 0.0
    %v945 = vand.u32 %v29, 4294901760
    %946 = vmatpush1.msra.mxu0 %v945
    %947 = vmatprep.subr.mxu0 0.0
    %948 = vmatpush1.msra.mxu0 0.0
    %949 = vmatprep.subr.mxu0 0.0
    %950 = vmatpush1.msra.mxu0 0.0
    %951 = vmatprep.subr.mxu0 0.0
    %952 = vmatpush1.msra.mxu0 0.0
    %953 = vmatprep.subr.mxu0 0.0
    %954 = vmatpush1.msra.mxu0 0.0
    %955 = vmatprep.subr.mxu0 0.0
    %956 = vmatpush1.msra.mxu0 0.0
    %957 = vmatprep.subr.mxu0 0.0
    %958 = vmatpush1.msra.mxu0 0.0
    %959 = vmatprep.subr.mxu0 0.0
    %960 = vmatpush1.msra.mxu0 0.0
    %961 = vmatprep.subr.mxu0 0.0
    %962 = vmatpush1.msra.mxu0 0.0
    %963 = vmatprep.subr.mxu0 0.0
    %964 = vmatpush1.msra.mxu0 0.0
    %965 = vmatprep.subr.mxu0 0.0
    %966 = vmatpush1.msra.mxu0 0.0
    %967 = vmatprep.subr.mxu0 0.0
    %968 = vmatpush1.msra.mxu0 0.0
    %969 = vmatprep.subr.mxu0 0.0
    %970 = vmatpush1.msra.mxu0 0.0
    %971 = vmatprep.subr.mxu0 0.0
    %972 = vmatpush1.msra.mxu0 0.0
    %973 = vmatprep.subr.mxu0 0.0
    %974 = vmatpush1.msra.mxu0 0.0
    %975 = vmatprep.subr.mxu0 0.0
    %976 = vmatpush1.msra.mxu0 0.0
    %977 = vmatprep.subr.mxu0 0.0
    %978 = vmatpush1.msra.mxu0 0.0
    %979 = vmatprep.subr.mxu0 0.0
    %980 = vmatpush1.msra.mxu0 0.0
    %981 = vmatprep.subr.mxu0 0.0
    %982 = vmatpush1.msra.mxu0 0.0
    %983 = vmatprep.subr.mxu0 0.0
    %984 = vmatpush1.msra.mxu0 0.0
    %985 = vmatprep.subr.mxu0 0.0
    %986 = vmatpush1.msra.mxu0 0.0
    %987 = vmatprep.subr.mxu0 0.0
    %988 = vmatpush1.msra.mxu0 0.0
    %989 = vmatprep.subr.mxu0 0.0
    %990 = vmatpush1.msra.mxu0 0.0
    %991 = vmatprep.subr.mxu0 0.0
    %992 = vmatpush1.msra.mxu0 0.0
    %993 = vmatprep.subr.mxu0 0.0
    %994 = vmatpush1.msra.mxu0 0.0
    %995 = vmatprep.subr.mxu0 0.0
    %996 = vmatpush1.msra.mxu0 0.0
    %997 = vmatprep.subr.mxu0 0.0
    %998 = vmatpush1.msra.mxu0 0.0
    %999 = vmatprep.subr.mxu0 0.0
    %1000 = vmatpush1.msra.mxu0 0.0
    %1001 = vmatprep.subr.mxu0 0.0
    %1002 = vmatpush1.msra.mxu0 0.0
    %1003 = vmatprep.mubr.f32.mxu0 0.0
    %v1004 = vand.u32 %v523, 4294901760
    %1005 = vmatmul.mubr.f32.gmra.mrb[0].mxu0 %v1004
    %v1006 = vpop.f32.mrb[0].mxu0
    %v1007 = vadd.f32 %v932, %v1006
    %v1008 = vpop.f32.mrb[0].mxu0
    %1009 = vdwg.mxu0
    %v1011 = vrot.slane %v1007, 1
    %v1013 = vadd.f32 %v1007, %v1011
    %v1014 = vmul.f32 %v1013, 0.5
    %v1015 = vsub.f32 %v1007, %v1011
    %v1016 = vmul.f32 %v1015, 0.25
    %v1017 = vmul.f32 %v1016, %v1015
    %v1018 = vadd.f32 %v1017, 1e-05
    %v1019 = vrsqrt.pop %v1018
    %v1021 = vrot.slane %v1019, 6
    %1022 = vrot.lane.b32.xlu0 %v1021, 32
    %v1023 = vpop.permute.xlu0 %1022
    %v1025 = vmul.f32 %v30, %v1023
    %v1026 = vlaneseq
    %v1027 = vshrl.u32 %v1026, 7
    %v1028 = vsub.s32 0, %v1027
    %v1029 = vrot.slane %v1014, %v1028
    %v1030 = vsub.f32 %v1007, %v1029
    %v1031 = vlaneseq
    %v1032 = vshrl.u32 %v1031, 7
    %v1033 = vsub.s32 2, %v1032
    %v1034 = vrot.slane %v1025, %v1033
    %1036 = vrot.lane.b32.xlu0 %v1034, 96
    %v1037 = vpop.permute.xlu0 %1036
    %v1039 = vmul.f32 %v1030, %v1037
    %v1040 = vlaneseq
    %v1041 = vshrl.u32 %v1040, 7
    %v1042 = vsub.s32 3, %v1041
    %v1043 = vrot.slane %v30, %v1042
    %1045 = vrot.lane.b32.xlu0 %v1043, 96
    %v1046 = vpop.permute.xlu0 %1045
    %v1048 = vadd.f32 %v1039, %v1046
    %v1049 = vmul.f32 %v1048, 0.01
    %v1050 = vmax.f32 %v1048, %v1049
    %1055 = vrot.lane.b32.xlu0 %v26, 96
    %v1056 = vpop.permute.xlu0 %1055
    %1057 = vrot.lane.b32.xlu0 %v27, 96
    %v1058 = vpop.permute.xlu0 %1057
    %1059 = vrot.lane.b32.xlu0 %v28, 96
    %v1060 = vpop.permute.xlu0 %1059
    %1061 = vrot.lane.b32.xlu0 %v29, 96
    %v1062 = vpop.permute.xlu0 %1061
    %v1068 = vsel %vm521, %v1050, 0
    %1070 = vmatprep.subr.mxu0 0.0
    %v1071 = vand.u32 %v1056, 4294901760
    %1072 = vmatpush1.msra.mxu0 %v1071
    %1073 = vmatprep.subr.mxu0 0.0
    %v1074 = vand.u32 %v1058, 4294901760
    %1075 = vmatpush1.msra.mxu0 %v1074
    %1076 = vmatprep.subr.mxu0 0.0
    %v1077 = vand.u32 %v1060, 4294901760
    %1078 = vmatpush1.msra.mxu0 %v1077
    %1079 = vmatprep.subr.mxu0 0.0
    %v1080 = vand.u32 %v1062, 4294901760
    %1081 = vmatpush1.msra.mxu0 %v1080
    %1082 = vmatprep.subr.mxu0 0.0
    %1083 = vmatpush1.msra.mxu0 0.0
    %1084 = vmatprep.subr.mxu0 0.0
    %1085 = vmatpush1.msra.mxu0 0.0
    %1086 = vmatprep.subr.mxu0 0.0
    %1087 = vmatpush1.msra.mxu0 0.0
    %1088 = vmatprep.subr.mxu0 0.0
    %1089 = vmatpush1.msra.mxu0 0.0
    %1090 = vmatprep.subr.mxu0 0.0
    %1091 = vmatpush1.msra.mxu0 0.0
    %1092 = vmatprep.subr.mxu0 0.0
    %1093 = vmatpush1.msra.mxu0 0.0
    %1094 = vmatprep.subr.mxu0 0.0
    %1095 = vmatpush1.msra.mxu0 0.0
    %1096 = vmatprep.subr.mxu0 0.0
    %1097 = vmatpush1.msra.mxu0 0.0
    %1098 = vmatprep.subr.mxu0 0.0
    %1099 = vmatpush1.msra.mxu0 0.0
    %1100 = vmatprep.subr.mxu0 0.0
    %1101 = vmatpush1.msra.mxu0 0.0
    %1102 = vmatprep.subr.mxu0 0.0
    %1103 = vmatpush1.msra.mxu0 0.0
    %1104 = vmatprep.subr.mxu0 0.0
    %1105 = vmatpush1.msra.mxu0 0.0
    %1106 = vmatprep.subr.mxu0 0.0
    %1107 = vmatpush1.msra.mxu0 0.0
    %1108 = vmatprep.subr.mxu0 0.0
    %1109 = vmatpush1.msra.mxu0 0.0
    %1110 = vmatprep.subr.mxu0 0.0
    %1111 = vmatpush1.msra.mxu0 0.0
    %1112 = vmatprep.subr.mxu0 0.0
    %1113 = vmatpush1.msra.mxu0 0.0
    %1114 = vmatprep.subr.mxu0 0.0
    %1115 = vmatpush1.msra.mxu0 0.0
    %1116 = vmatprep.subr.mxu0 0.0
    %1117 = vmatpush1.msra.mxu0 0.0
    %1118 = vmatprep.subr.mxu0 0.0
    %1119 = vmatpush1.msra.mxu0 0.0
    %1120 = vmatprep.subr.mxu0 0.0
    %1121 = vmatpush1.msra.mxu0 0.0
    %1122 = vmatprep.subr.mxu0 0.0
    %1123 = vmatpush1.msra.mxu0 0.0
    %1124 = vmatprep.subr.mxu0 0.0
    %1125 = vmatpush1.msra.mxu0 0.0
    %1126 = vmatprep.subr.mxu0 0.0
    %1127 = vmatpush1.msra.mxu0 0.0
    %1128 = vmatprep.subr.mxu0 0.0
    %1129 = vmatpush1.msra.mxu0 0.0
    %1130 = vmatprep.subr.mxu0 0.0
    %1131 = vmatpush1.msra.mxu0 0.0
    %1132 = vmatprep.subr.mxu0 0.0
    %1133 = vmatpush1.msra.mxu0 0.0
    %1134 = vmatprep.subr.mxu0 0.0
    %1135 = vmatpush1.msra.mxu0 0.0
    %1136 = vmatprep.subr.mxu0 0.0
    %1137 = vmatpush1.msra.mxu0 0.0
    %1138 = vmatprep.mubr.f32.mxu0 0.0
    %v1139 = vand.u32 %v1068, 4294901760
    %v1140 = vsub.f32 %v1068, %v1139
    %v1141 = vand.u32 %v1140, 4294901760
    %v1142 = vsub.f32 %v1140, %v1141
    %v1143 = vand.u32 %v1142, 4294901760
    %1144 = vmatmul.mubr.f32.gmra.mrb[0].mxu0 %v1143
    %v1145 = vpop.f32.mrb[0].mxu0
    %v1146 = vadd.f32 0.0, %v1145
    %v1147 = vpop.f32.mrb[0].mxu0
    %1148 = vdwg.mxu0
    %1149 = vmatprep.subr.mxu0 0.0
    %v1150 = vand.u32 %v1056, 4294901760
    %v1151 = vsub.f32 %v1056, %v1150
    %v1152 = vand.u32 %v1151, 4294901760
    %v1153 = vsub.f32 %v1151, %v1152
    %v1154 = vand.u32 %v1153, 4294901760
    %1155 = vmatpush1.msra.mxu0 %v1154
    %1156 = vmatprep.subr.mxu0 0.0
    %v1157 = vand.u32 %v1058, 4294901760
    %v1158 = vsub.f32 %v1058, %v1157
    %v1159 = vand.u32 %v1158, 4294901760
    %v1160 = vsub.f32 %v1158, %v1159
    %v1161 = vand.u32 %v1160, 4294901760
    %1162 = vmatpush1.msra.mxu0 %v1161
    %1163 = vmatprep.subr.mxu0 0.0
    %v1164 = vand.u32 %v1060, 4294901760
    %v1165 = vsub.f32 %v1060, %v1164
    %v1166 = vand.u32 %v1165, 4294901760
    %v1167 = vsub.f32 %v1165, %v1166
    %v1168 = vand.u32 %v1167, 4294901760
    %1169 = vmatpush1.msra.mxu0 %v1168
    %1170 = vmatprep.subr.mxu0 0.0
    %v1171 = vand.u32 %v1062, 4294901760
    %v1172 = vsub.f32 %v1062, %v1171
    %v1173 = vand.u32 %v1172, 4294901760
    %v1174 = vsub.f32 %v1172, %v1173
    %v1175 = vand.u32 %v1174, 4294901760
    %1176 = vmatpush1.msra.mxu0 %v1175
    %1177 = vmatprep.subr.mxu0 0.0
    %1178 = vmatpush1.msra.mxu0 0.0
    %1179 = vmatprep.subr.mxu0 0.0
    %1180 = vmatpush1.msra.mxu0 0.0
    %1181 = vmatprep.subr.mxu0 0.0
    %1182 = vmatpush1.msra.mxu0 0.0
    %1183 = vmatprep.subr.mxu0 0.0
    %1184 = vmatpush1.msra.mxu0 0.0
    %1185 = vmatprep.subr.mxu0 0.0
    %1186 = vmatpush1.msra.mxu0 0.0
    %1187 = vmatprep.subr.mxu0 0.0
    %1188 = vmatpush1.msra.mxu0 0.0
    %1189 = vmatprep.subr.mxu0 0.0
    %1190 = vmatpush1.msra.mxu0 0.0
    %1191 = vmatprep.subr.mxu0 0.0
    %1192 = vmatpush1.msra.mxu0 0.0
    %1193 = vmatprep.subr.mxu0 0.0
    %1194 = vmatpush1.msra.mxu0 0.0
    %1195 = vmatprep.subr.mxu0 0.0
    %1196 = vmatpush1.msra.mxu0 0.0
    %1197 = vmatprep.subr.mxu0 0.0
    %1198 = vmatpush1.msra.mxu0 0.0
    %1199 = vmatprep.subr.mxu0 0.0
    %1200 = vmatpush1.msra.mxu0 0.0
    %1201 = vmatprep.subr.mxu0 0.0
    %1202 = vmatpush1.msra.mxu0 0.0
    %1203 = vmatprep.subr.mxu0 0.0
    %1204 = vmatpush1.msra.mxu0 0.0
    %1205 = vmatprep.subr.mxu0 0.0
    %1206 = vmatpush1.msra.mxu0 0.0
    %1207 = vmatprep.subr.mxu0 0.0
    %1208 = vmatpush1.msra.mxu0 0.0
    %1209 = vmatprep.subr.mxu0 0.0
    %1210 = vmatpush1.msra.mxu0 0.0
    %1211 = vmatprep.subr.mxu0 0.0
    %1212 = vmatpush1.msra.mxu0 0.0
    %1213 = vmatprep.subr.mxu0 0.0
    %1214 = vmatpush1.msra.mxu0 0.0
    %1215 = vmatprep.subr.mxu0 0.0
    %1216 = vmatpush1.msra.mxu0 0.0
    %1217 = vmatprep.subr.mxu0 0.0
    %1218 = vmatpush1.msra.mxu0 0.0
    %1219 = vmatprep.subr.mxu0 0.0
    %1220 = vmatpush1.msra.mxu0 0.0
    %1221 = vmatprep.subr.mxu0 0.0
    %1222 = vmatpush1.msra.mxu0 0.0
    %1223 = vmatprep.subr.mxu0 0.0
    %1224 = vmatpush1.msra.mxu0 0.0
    %1225 = vmatprep.subr.mxu0 0.0
    %1226 = vmatpush1.msra.mxu0 0.0
    %1227 = vmatprep.subr.mxu0 0.0
    %1228 = vmatpush1.msra.mxu0 0.0
    %1229 = vmatprep.subr.mxu0 0.0
    %1230 = vmatpush1.msra.mxu0 0.0
    %1231 = vmatprep.subr.mxu0 0.0
    %1232 = vmatpush1.msra.mxu0 0.0
    %1233 = vmatprep.mubr.f32.mxu0 0.0
    %v1234 = vand.u32 %v1068, 4294901760
    %1235 = vmatmul.mubr.f32.gmra.mrb[0].mxu0 %v1234
    %v1236 = vpop.f32.mrb[0].mxu0
    %v1237 = vadd.f32 %v1146, %v1236
    %v1238 = vpop.f32.mrb[0].mxu0
    %1239 = vdwg.mxu0
    %1240 = vmatprep.subr.mxu0 0.0
    %v1241 = vand.u32 %v1056, 4294901760
    %v1242 = vsub.f32 %v1056, %v1241
    %1243 = vmatpush1.msra.mxu0 %v1242
    %1244 = vmatprep.subr.mxu0 0.0
    %v1245 = vand.u32 %v1058, 4294901760
    %v1246 = vsub.f32 %v1058, %v1245
    %1247 = vmatpush1.msra.mxu0 %v1246
    %1248 = vmatprep.subr.mxu0 0.0
    %v1249 = vand.u32 %v1060, 4294901760
    %v1250 = vsub.f32 %v1060, %v1249
    %1251 = vmatpush1.msra.mxu0 %v1250
    %1252 = vmatprep.subr.mxu0 0.0
    %v1253 = vand.u32 %v1062, 4294901760
    %v1254 = vsub.f32 %v1062, %v1253
    %1255 = vmatpush1.msra.mxu0 %v1254
    %1256 = vmatprep.subr.mxu0 0.0
    %1257 = vmatpush1.msra.mxu0 0.0
    %1258 = vmatprep.subr.mxu0 0.0
    %1259 = vmatpush1.msra.mxu0 0.0
    %1260 = vmatprep.subr.mxu0 0.0
    %1261 = vmatpush1.msra.mxu0 0.0
    %1262 = vmatprep.subr.mxu0 0.0
    %1263 = vmatpush1.msra.mxu0 0.0
    %1264 = vmatprep.subr.mxu0 0.0
    %1265 = vmatpush1.msra.mxu0 0.0
    %1266 = vmatprep.subr.mxu0 0.0
    %1267 = vmatpush1.msra.mxu0 0.0
    %1268 = vmatprep.subr.mxu0 0.0
    %1269 = vmatpush1.msra.mxu0 0.0
    %1270 = vmatprep.subr.mxu0 0.0
    %1271 = vmatpush1.msra.mxu0 0.0
    %1272 = vmatprep.subr.mxu0 0.0
    %1273 = vmatpush1.msra.mxu0 0.0
    %1274 = vmatprep.subr.mxu0 0.0
    %1275 = vmatpush1.msra.mxu0 0.0
    %1276 = vmatprep.subr.mxu0 0.0
    %1277 = vmatpush1.msra.mxu0 0.0
    %1278 = vmatprep.subr.mxu0 0.0
    %1279 = vmatpush1.msra.mxu0 0.0
    %1280 = vmatprep.subr.mxu0 0.0
    %1281 = vmatpush1.msra.mxu0 0.0
    %1282 = vmatprep.subr.mxu0 0.0
    %1283 = vmatpush1.msra.mxu0 0.0
    %1284 = vmatprep.subr.mxu0 0.0
    %1285 = vmatpush1.msra.mxu0 0.0
    %1286 = vmatprep.subr.mxu0 0.0
    %1287 = vmatpush1.msra.mxu0 0.0
    %1288 = vmatprep.subr.mxu0 0.0
    %1289 = vmatpush1.msra.mxu0 0.0
    %1290 = vmatprep.subr.mxu0 0.0
    %1291 = vmatpush1.msra.mxu0 0.0
    %1292 = vmatprep.subr.mxu0 0.0
    %1293 = vmatpush1.msra.mxu0 0.0
    %1294 = vmatprep.subr.mxu0 0.0
    %1295 = vmatpush1.msra.mxu0 0.0
    %1296 = vmatprep.subr.mxu0 0.0
    %1297 = vmatpush1.msra.mxu0 0.0
    %1298 = vmatprep.subr.mxu0 0.0
    %1299 = vmatpush1.msra.mxu0 0.0
    %1300 = vmatprep.subr.mxu0 0.0
    %1301 = vmatpush1.msra.mxu0 0.0
    %1302 = vmatprep.subr.mxu0 0.0
    %1303 = vmatpush1.msra.mxu0 0.0
    %1304 = vmatprep.subr.mxu0 0.0
    %1305 = vmatpush1.msra.mxu0 0.0
    %1306 = vmatprep.subr.mxu0 0.0
    %1307 = vmatpush1.msra.mxu0 0.0
    %1308 = vmatprep.subr.mxu0 0.0
    %1309 = vmatpush1.msra.mxu0 0.0
    %1310 = vmatprep.subr.mxu0 0.0
    %1311 = vmatpush1.msra.mxu0 0.0
    %1312 = vmatprep.mubr.f32.mxu0 0.0
    %v1313 = vand.u32 %v1068, 4294901760
    %v1314 = vsub.f32 %v1068, %v1313
    %1315 = vmatmul.mubr.f32.gmra.mrb[0].mxu0 %v1314
    %v1316 = vpop.f32.mrb[0].mxu0
    %v1317 = vadd.f32 %v1237, %v1316
    %v1318 = vpop.f32.mrb[0].mxu0
    %1319 = vdwg.mxu0
    %1320 = vmatprep.subr.mxu0 0.0
    %v1321 = vand.u32 %v1056, 4294901760
    %1322 = vmatpush1.msra.mxu0 %v1321
    %1323 = vmatprep.subr.mxu0 0.0
    %v1324 = vand.u32 %v1058, 4294901760
    %1325 = vmatpush1.msra.mxu0 %v1324
    %1326 = vmatprep.subr.mxu0 0.0
    %v1327 = vand.u32 %v1060, 4294901760
    %1328 = vmatpush1.msra.mxu0 %v1327
    %1329 = vmatprep.subr.mxu0 0.0
    %v1330 = vand.u32 %v1062, 4294901760
    %1331 = vmatpush1.msra.mxu0 %v1330
    %1332 = vmatprep.subr.mxu0 0.0
    %1333 = vmatpush1.msra.mxu0 0.0
    %1334 = vmatprep.subr.mxu0 0.0
    %1335 = vmatpush1.msra.mxu0 0.0
    %1336 = vmatprep.subr.mxu0 0.0
    %1337 = vmatpush1.msra.mxu0 0.0
    %1338 = vmatprep.subr.mxu0 0.0
    %1339 = vmatpush1.msra.mxu0 0.0
    %1340 = vmatprep.subr.mxu0 0.0
    %1341 = vmatpush1.msra.mxu0 0.0
    %1342 = vmatprep.subr.mxu0 0.0
    %1343 = vmatpush1.msra.mxu0 0.0
    %1344 = vmatprep.subr.mxu0 0.0
    %1345 = vmatpush1.msra.mxu0 0.0
    %1346 = vmatprep.subr.mxu0 0.0
    %1347 = vmatpush1.msra.mxu0 0.0
    %1348 = vmatprep.subr.mxu0 0.0
    %1349 = vmatpush1.msra.mxu0 0.0
    %1350 = vmatprep.subr.mxu0 0.0
    %1351 = vmatpush1.msra.mxu0 0.0
    %1352 = vmatprep.subr.mxu0 0.0
    %1353 = vmatpush1.msra.mxu0 0.0
    %1354 = vmatprep.subr.mxu0 0.0
    %1355 = vmatpush1.msra.mxu0 0.0
    %1356 = vmatprep.subr.mxu0 0.0
    %1357 = vmatpush1.msra.mxu0 0.0
    %1358 = vmatprep.subr.mxu0 0.0
    %1359 = vmatpush1.msra.mxu0 0.0
    %1360 = vmatprep.subr.mxu0 0.0
    %1361 = vmatpush1.msra.mxu0 0.0
    %1362 = vmatprep.subr.mxu0 0.0
    %1363 = vmatpush1.msra.mxu0 0.0
    %1364 = vmatprep.subr.mxu0 0.0
    %1365 = vmatpush1.msra.mxu0 0.0
    %1366 = vmatprep.subr.mxu0 0.0
    %1367 = vmatpush1.msra.mxu0 0.0
    %1368 = vmatprep.subr.mxu0 0.0
    %1369 = vmatpush1.msra.mxu0 0.0
    %1370 = vmatprep.subr.mxu0 0.0
    %1371 = vmatpush1.msra.mxu0 0.0
    %1372 = vmatprep.subr.mxu0 0.0
    %1373 = vmatpush1.msra.mxu0 0.0
    %1374 = vmatprep.subr.mxu0 0.0
    %1375 = vmatpush1.msra.mxu0 0.0
    %1376 = vmatprep.subr.mxu0 0.0
    %1377 = vmatpush1.msra.mxu0 0.0
    %1378 = vmatprep.subr.mxu0 0.0
    %1379 = vmatpush1.msra.mxu0 0.0
    %1380 = vmatprep.subr.mxu0 0.0
    %1381 = vmatpush1.msra.mxu0 0.0
    %1382 = vmatprep.subr.mxu0 0.0
    %1383 = vmatpush1.msra.mxu0 0.0
    %1384 = vmatprep.subr.mxu0 0.0
    %1385 = vmatpush1.msra.mxu0 0.0
    %1386 = vmatprep.subr.mxu0 0.0
    %1387 = vmatpush1.msra.mxu0 0.0
    %1388 = vmatprep.mubr.f32.mxu0 0.0
    %v1389 = vand.u32 %v1068, 4294901760
    %v1390 = vsub.f32 %v1068, %v1389
    %v1391 = vand.u32 %v1390, 4294901760
    %1392 = vmatmul.mubr.f32.gmra.mrb[0].mxu0 %v1391
    %v1393 = vpop.f32.mrb[0].mxu0
    %v1394 = vadd.f32 %v1317, %v1393
    %v1395 = vpop.f32.mrb[0].mxu0
    %1396 = vdwg.mxu0
    %1397 = vmatprep.subr.mxu0 0.0
    %v1398 = vand.u32 %v1056, 4294901760
    %v1399 = vsub.f32 %v1056, %v1398
    %v1400 = vand.u32 %v1399, 4294901760
    %1401 = vmatpush1.msra.mxu0 %v1400
    %1402 = vmatprep.subr.mxu0 0.0
    %v1403 = vand.u32 %v1058, 4294901760
    %v1404 = vsub.f32 %v1058, %v1403
    %v1405 = vand.u32 %v1404, 4294901760
    %1406 = vmatpush1.msra.mxu0 %v1405
    %1407 = vmatprep.subr.mxu0 0.0
    %v1408 = vand.u32 %v1060, 4294901760
    %v1409 = vsub.f32 %v1060, %v1408
    %v1410 = vand.u32 %v1409, 4294901760
    %1411 = vmatpush1.msra.mxu0 %v1410
    %1412 = vmatprep.subr.mxu0 0.0
    %v1413 = vand.u32 %v1062, 4294901760
    %v1414 = vsub.f32 %v1062, %v1413
    %v1415 = vand.u32 %v1414, 4294901760
    %1416 = vmatpush1.msra.mxu0 %v1415
    %1417 = vmatprep.subr.mxu0 0.0
    %1418 = vmatpush1.msra.mxu0 0.0
    %1419 = vmatprep.subr.mxu0 0.0
    %1420 = vmatpush1.msra.mxu0 0.0
    %1421 = vmatprep.subr.mxu0 0.0
    %1422 = vmatpush1.msra.mxu0 0.0
    %1423 = vmatprep.subr.mxu0 0.0
    %1424 = vmatpush1.msra.mxu0 0.0
    %1425 = vmatprep.subr.mxu0 0.0
    %1426 = vmatpush1.msra.mxu0 0.0
    %1427 = vmatprep.subr.mxu0 0.0
    %1428 = vmatpush1.msra.mxu0 0.0
    %1429 = vmatprep.subr.mxu0 0.0
    %1430 = vmatpush1.msra.mxu0 0.0
    %1431 = vmatprep.subr.mxu0 0.0
    %1432 = vmatpush1.msra.mxu0 0.0
    %1433 = vmatprep.subr.mxu0 0.0
    %1434 = vmatpush1.msra.mxu0 0.0
    %1435 = vmatprep.subr.mxu0 0.0
    %1436 = vmatpush1.msra.mxu0 0.0
    %1437 = vmatprep.subr.mxu0 0.0
    %1438 = vmatpush1.msra.mxu0 0.0
    %1439 = vmatprep.subr.mxu0 0.0
    %1440 = vmatpush1.msra.mxu0 0.0
    %1441 = vmatprep.subr.mxu0 0.0
    %1442 = vmatpush1.msra.mxu0 0.0
    %1443 = vmatprep.subr.mxu0 0.0
    %1444 = vmatpush1.msra.mxu0 0.0
    %1445 = vmatprep.subr.mxu0 0.0
    %1446 = vmatpush1.msra.mxu0 0.0
    %1447 = vmatprep.subr.mxu0 0.0
    %1448 = vmatpush1.msra.mxu0 0.0
    %1449 = vmatprep.subr.mxu0 0.0
    %1450 = vmatpush1.msra.mxu0 0.0
    %1451 = vmatprep.subr.mxu0 0.0
    %1452 = vmatpush1.msra.mxu0 0.0
    %1453 = vmatprep.subr.mxu0 0.0
    %1454 = vmatpush1.msra.mxu0 0.0
    %1455 = vmatprep.subr.mxu0 0.0
    %1456 = vmatpush1.msra.mxu0 0.0
    %1457 = vmatprep.subr.mxu0 0.0
    %1458 = vmatpush1.msra.mxu0 0.0
    %1459 = vmatprep.subr.mxu0 0.0
    %1460 = vmatpush1.msra.mxu0 0.0
    %1461 = vmatprep.subr.mxu0 0.0
    %1462 = vmatpush1.msra.mxu0 0.0
    %1463 = vmatprep.subr.mxu0 0.0
    %1464 = vmatpush1.msra.mxu0 0.0
    %1465 = vmatprep.subr.mxu0 0.0
    %1466 = vmatpush1.msra.mxu0 0.0
    %1467 = vmatprep.subr.mxu0 0.0
    %1468 = vmatpush1.msra.mxu0 0.0
    %1469 = vmatprep.subr.mxu0 0.0
    %1470 = vmatpush1.msra.mxu0 0.0
    %1471 = vmatprep.subr.mxu0 0.0
    %1472 = vmatpush1.msra.mxu0 0.0
    %1473 = vmatprep.mubr.f32.mxu0 0.0
    %v1474 = vand.u32 %v1068, 4294901760
    %1475 = vmatmul.mubr.f32.gmra.mrb[0].mxu0 %v1474
    %v1476 = vpop.f32.mrb[0].mxu0
    %v1477 = vadd.f32 %v1394, %v1476
    %v1478 = vpop.f32.mrb[0].mxu0
    %1479 = vdwg.mxu0
    %1480 = vmatprep.subr.mxu0 0.0
    %v1481 = vand.u32 %v1056, 4294901760
    %1482 = vmatpush1.msra.mxu0 %v1481
    %1483 = vmatprep.subr.mxu0 0.0
    %v1484 = vand.u32 %v1058, 4294901760
    %1485 = vmatpush1.msra.mxu0 %v1484
    %1486 = vmatprep.subr.mxu0 0.0
    %v1487 = vand.u32 %v1060, 4294901760
    %1488 = vmatpush1.msra.mxu0 %v1487
    %1489 = vmatprep.subr.mxu0 0.0
    %v1490 = vand.u32 %v1062, 4294901760
    %1491 = vmatpush1.msra.mxu0 %v1490
    %1492 = vmatprep.subr.mxu0 0.0
    %1493 = vmatpush1.msra.mxu0 0.0
    %1494 = vmatprep.subr.mxu0 0.0
    %1495 = vmatpush1.msra.mxu0 0.0
    %1496 = vmatprep.subr.mxu0 0.0
    %1497 = vmatpush1.msra.mxu0 0.0
    %1498 = vmatprep.subr.mxu0 0.0
    %1499 = vmatpush1.msra.mxu0 0.0
    %1500 = vmatprep.subr.mxu0 0.0
    %1501 = vmatpush1.msra.mxu0 0.0
    %1502 = vmatprep.subr.mxu0 0.0
    %1503 = vmatpush1.msra.mxu0 0.0
    %1504 = vmatprep.subr.mxu0 0.0
    %1505 = vmatpush1.msra.mxu0 0.0
    %1506 = vmatprep.subr.mxu0 0.0
    %1507 = vmatpush1.msra.mxu0 0.0
    %1508 = vmatprep.subr.mxu0 0.0
    %1509 = vmatpush1.msra.mxu0 0.0
    %1510 = vmatprep.subr.mxu0 0.0
    %1511 = vmatpush1.msra.mxu0 0.0
    %1512 = vmatprep.subr.mxu0 0.0
    %1513 = vmatpush1.msra.mxu0 0.0
    %1514 = vmatprep.subr.mxu0 0.0
    %1515 = vmatpush1.msra.mxu0 0.0
    %1516 = vmatprep.subr.mxu0 0.0
    %1517 = vmatpush1.msra.mxu0 0.0
    %1518 = vmatprep.subr.mxu0 0.0
    %1519 = vmatpush1.msra.mxu0 0.0
    %1520 = vmatprep.subr.mxu0 0.0
    %1521 = vmatpush1.msra.mxu0 0.0
    %1522 = vmatprep.subr.mxu0 0.0
    %1523 = vmatpush1.msra.mxu0 0.0
    %1524 = vmatprep.subr.mxu0 0.0
    %1525 = vmatpush1.msra.mxu0 0.0
    %1526 = vmatprep.subr.mxu0 0.0
    %1527 = vmatpush1.msra.mxu0 0.0
    %1528 = vmatprep.subr.mxu0 0.0
    %1529 = vmatpush1.msra.mxu0 0.0
    %1530 = vmatprep.subr.mxu0 0.0
    %1531 = vmatpush1.msra.mxu0 0.0
    %1532 = vmatprep.subr.mxu0 0.0
    %1533 = vmatpush1.msra.mxu0 0.0
    %1534 = vmatprep.subr.mxu0 0.0
    %1535 = vmatpush1.msra.mxu0 0.0
    %1536 = vmatprep.subr.mxu0 0.0
    %1537 = vmatpush1.msra.mxu0 0.0
    %1538 = vmatprep.subr.mxu0 0.0
    %1539 = vmatpush1.msra.mxu0 0.0
    %1540 = vmatprep.subr.mxu0 0.0
    %1541 = vmatpush1.msra.mxu0 0.0
    %1542 = vmatprep.subr.mxu0 0.0
    %1543 = vmatpush1.msra.mxu0 0.0
    %1544 = vmatprep.subr.mxu0 0.0
    %1545 = vmatpush1.msra.mxu0 0.0
    %1546 = vmatprep.subr.mxu0 0.0
    %1547 = vmatpush1.msra.mxu0 0.0
    %1548 = vmatprep.mubr.f32.mxu0 0.0
    %v1549 = vand.u32 %v1068, 4294901760
    %1550 = vmatmul.mubr.f32.gmra.mrb[0].mxu0 %v1549
    %v1551 = vpop.f32.mrb[0].mxu0
    %v1552 = vadd.f32 %v1477, %v1551
    %v1553 = vpop.f32.mrb[0].mxu0
    %1554 = vdwg.mxu0
    %v1556 = vrot.slane %v1552, 1
    %v1558 = vadd.f32 %v1552, %v1556
    %v1559 = vmul.f32 %v1558, 0.5
    %v1560 = vsub.f32 %v1552, %v1556
    %v1561 = vmul.f32 %v1560, 0.25
    %v1562 = vmul.f32 %v1561, %v1560
    %v1563 = vadd.f32 %v1562, 1e-05
    %v1564 = vrsqrt.pop %v1563
    %v1566 = vrot.slane %v1564, 4
    %1567 = vrot.lane.b32.xlu0 %v1566, 32
    %v1568 = vpop.permute.xlu0 %1567
    %v1570 = vmul.f32 %v30, %v1568
    %v1571 = vlaneseq
    %v1572 = vshrl.u32 %v1571, 7
    %v1573 = vsub.s32 0, %v1572
    %v1574 = vrot.slane %v1559, %v1573
    %v1575 = vsub.f32 %v1552, %v1574
    %v1576 = vlaneseq
    %v1577 = vshrl.u32 %v1576, 7
    %v1578 = vsub.s32 4, %v1577
    %v1579 = vrot.slane %v1570, %v1578
    %1581 = vrot.lane.b32.xlu0 %v1579, 96
    %v1582 = vpop.permute.xlu0 %1581
    %v1584 = vmul.f32 %v1575, %v1582
    %v1585 = vlaneseq
    %v1586 = vshrl.u32 %v1585, 7
    %v1587 = vsub.s32 5, %v1586
    %v1588 = vrot.slane %v30, %v1587
    %1590 = vrot.lane.b32.xlu0 %v1588, 96
    %v1591 = vpop.permute.xlu0 %1590
    %v1593 = vadd.f32 %v1584, %v1591
    %v1594 = vmul.f32 %v1593, 0.01
    %v1595 = vmax.f32 %v1593, %v1594
    %v1596 = vlaneseq
    %v1597 = vshrl.u32 %v1596, 7
    %v1598 = vsub.s32 6, %v1597
    %v1599 = vrot.slane %v30, %v1598
    %1600 = vrot.lane.b32.xlu0 %v26, 64
    %v1601 = vpop.permute.xlu0 %1600
    %1602 = vrot.lane.b32.xlu0 %v27, 64
    %v1603 = vpop.permute.xlu0 %1602
    %1604 = vrot.lane.b32.xlu0 %v28, 64
    %v1605 = vpop.permute.xlu0 %1604
    %1606 = vrot.lane.b32.xlu0 %v29, 64
    %v1607 = vpop.permute.xlu0 %1606
    %1613 = vrot.lane.b32.xlu0 %v1599, 96
    %v1614 = vpop.permute.xlu0 %1613
    %v1617 = vsel %vm521, %v1595, 0
    %1619 = vmatprep.subr.mxu0 0.0
    %v1620 = vand.u32 %v1601, 4294901760
    %1621 = vmatpush1.msra.mxu0 %v1620
    %1622 = vmatprep.subr.mxu0 0.0
    %v1623 = vand.u32 %v1603, 4294901760
    %1624 = vmatpush1.msra.mxu0 %v1623
    %1625 = vmatprep.subr.mxu0 0.0
    %v1626 = vand.u32 %v1605, 4294901760
    %1627 = vmatpush1.msra.mxu0 %v1626
    %1628 = vmatprep.subr.mxu0 0.0
    %v1629 = vand.u32 %v1607, 4294901760
    %1630 = vmatpush1.msra.mxu0 %v1629
    %1631 = vmatprep.subr.mxu0 0.0
    %1632 = vmatpush1.msra.mxu0 0.0
    %1633 = vmatprep.subr.mxu0 0.0
    %1634 = vmatpush1.msra.mxu0 0.0
    %1635 = vmatprep.subr.mxu0 0.0
    %1636 = vmatpush1.msra.mxu0 0.0
    %1637 = vmatprep.subr.mxu0 0.0
    %1638 = vmatpush1.msra.mxu0 0.0
    %1639 = vmatprep.subr.mxu0 0.0
    %1640 = vmatpush1.msra.mxu0 0.0
    %1641 = vmatprep.subr.mxu0 0.0
    %1642 = vmatpush1.msra.mxu0 0.0
    %1643 = vmatprep.subr.mxu0 0.0
    %1644 = vmatpush1.msra.mxu0 0.0
    %1645 = vmatprep.subr.mxu0 0.0
    %1646 = vmatpush1.msra.mxu0 0.0
    %1647 = vmatprep.subr.mxu0 0.0
    %1648 = vmatpush1.msra.mxu0 0.0
    %1649 = vmatprep.subr.mxu0 0.0
    %1650 = vmatpush1.msra.mxu0 0.0
    %1651 = vmatprep.subr.mxu0 0.0
    %1652 = vmatpush1.msra.mxu0 0.0
    %1653 = vmatprep.subr.mxu0 0.0
    %1654 = vmatpush1.msra.mxu0 0.0
    %1655 = vmatprep.subr.mxu0 0.0
    %1656 = vmatpush1.msra.mxu0 0.0
    %1657 = vmatprep.subr.mxu0 0.0
    %1658 = vmatpush1.msra.mxu0 0.0
    %1659 = vmatprep.subr.mxu0 0.0
    %1660 = vmatpush1.msra.mxu0 0.0
    %1661 = vmatprep.subr.mxu0 0.0
    %1662 = vmatpush1.msra.mxu0 0.0
    %1663 = vmatprep.subr.mxu0 0.0
    %1664 = vmatpush1.msra.mxu0 0.0
    %1665 = vmatprep.subr.mxu0 0.0
    %1666 = vmatpush1.msra.mxu0 0.0
    %1667 = vmatprep.subr.mxu0 0.0
    %1668 = vmatpush1.msra.mxu0 0.0
    %1669 = vmatprep.subr.mxu0 0.0
    %1670 = vmatpush1.msra.mxu0 0.0
    %1671 = vmatprep.subr.mxu0 0.0
    %1672 = vmatpush1.msra.mxu0 0.0
    %1673 = vmatprep.subr.mxu0 0.0
    %1674 = vmatpush1.msra.mxu0 0.0
    %1675 = vmatprep.subr.mxu0 0.0
    %1676 = vmatpush1.msra.mxu0 0.0
    %1677 = vmatprep.subr.mxu0 0.0
    %1678 = vmatpush1.msra.mxu0 0.0
    %1679 = vmatprep.subr.mxu0 0.0
    %1680 = vmatpush1.msra.mxu0 0.0
    %1681 = vmatprep.subr.mxu0 0.0
    %1682 = vmatpush1.msra.mxu0 0.0
    %1683 = vmatprep.subr.mxu0 0.0
    %1684 = vmatpush1.msra.mxu0 0.0
    %1685 = vmatprep.subr.mxu0 0.0
    %1686 = vmatpush1.msra.mxu0 0.0
    %1687 = vmatprep.mubr.f32.mxu0 0.0
    %v1688 = vand.u32 %v1617, 4294901760
    %v1689 = vsub.f32 %v1617, %v1688
    %v1690 = vand.u32 %v1689, 4294901760
    %v1691 = vsub.f32 %v1689, %v1690
    %v1692 = vand.u32 %v1691, 4294901760
    %1693 = vmatmul.mubr.f32.gmra.mrb[0].mxu0 %v1692
    %v1694 = vpop.f32.mrb[0].mxu0
    %v1695 = vadd.f32 %v1614, %v1694
    %v1696 = vpop.f32.mrb[0].mxu0
    %1697 = vdwg.mxu0
    %1698 = vmatprep.subr.mxu0 0.0
    %v1699 = vand.u32 %v1601, 4294901760
    %v1700 = vsub.f32 %v1601, %v1699
    %v1701 = vand.u32 %v1700, 4294901760
    %v1702 = vsub.f32 %v1700, %v1701
    %v1703 = vand.u32 %v1702, 4294901760
    %1704 = vmatpush1.msra.mxu0 %v1703
    %1705 = vmatprep.subr.mxu0 0.0
    %v1706 = vand.u32 %v1603, 4294901760
    %v1707 = vsub.f32 %v1603, %v1706
    %v1708 = vand.u32 %v1707, 4294901760
    %v1709 = vsub.f32 %v1707, %v1708
    %v1710 = vand.u32 %v1709, 4294901760
    %1711 = vmatpush1.msra.mxu0 %v1710
    %1712 = vmatprep.subr.mxu0 0.0
    %v1713 = vand.u32 %v1605, 4294901760
    %v1714 = vsub.f32 %v1605, %v1713
    %v1715 = vand.u32 %v1714, 4294901760
    %v1716 = vsub.f32 %v1714, %v1715
    %v1717 = vand.u32 %v1716, 4294901760
    %1718 = vmatpush1.msra.mxu0 %v1717
    %1719 = vmatprep.subr.mxu0 0.0
    %v1720 = vand.u32 %v1607, 4294901760
    %v1721 = vsub.f32 %v1607, %v1720
    %v1722 = vand.u32 %v1721, 4294901760
    %v1723 = vsub.f32 %v1721, %v1722
    %v1724 = vand.u32 %v1723, 4294901760
    %1725 = vmatpush1.msra.mxu0 %v1724
    %1726 = vmatprep.subr.mxu0 0.0
    %1727 = vmatpush1.msra.mxu0 0.0
    %1728 = vmatprep.subr.mxu0 0.0
    %1729 = vmatpush1.msra.mxu0 0.0
    %1730 = vmatprep.subr.mxu0 0.0
    %1731 = vmatpush1.msra.mxu0 0.0
    %1732 = vmatprep.subr.mxu0 0.0
    %1733 = vmatpush1.msra.mxu0 0.0
    %1734 = vmatprep.subr.mxu0 0.0
    %1735 = vmatpush1.msra.mxu0 0.0
    %1736 = vmatprep.subr.mxu0 0.0
    %1737 = vmatpush1.msra.mxu0 0.0
    %1738 = vmatprep.subr.mxu0 0.0
    %1739 = vmatpush1.msra.mxu0 0.0
    %1740 = vmatprep.subr.mxu0 0.0
    %1741 = vmatpush1.msra.mxu0 0.0
    %1742 = vmatprep.subr.mxu0 0.0
    %1743 = vmatpush1.msra.mxu0 0.0
    %1744 = vmatprep.subr.mxu0 0.0
    %1745 = vmatpush1.msra.mxu0 0.0
    %1746 = vmatprep.subr.mxu0 0.0
    %1747 = vmatpush1.msra.mxu0 0.0
    %1748 = vmatprep.subr.mxu0 0.0
    %1749 = vmatpush1.msra.mxu0 0.0
    %1750 = vmatprep.subr.mxu0 0.0
    %1751 = vmatpush1.msra.mxu0 0.0
    %1752 = vmatprep.subr.mxu0 0.0
    %1753 = vmatpush1.msra.mxu0 0.0
    %1754 = vmatprep.subr.mxu0 0.0
    %1755 = vmatpush1.msra.mxu0 0.0
    %1756 = vmatprep.subr.mxu0 0.0
    %1757 = vmatpush1.msra.mxu0 0.0
    %1758 = vmatprep.subr.mxu0 0.0
    %1759 = vmatpush1.msra.mxu0 0.0
    %1760 = vmatprep.subr.mxu0 0.0
    %1761 = vmatpush1.msra.mxu0 0.0
    %1762 = vmatprep.subr.mxu0 0.0
    %1763 = vmatpush1.msra.mxu0 0.0
    %1764 = vmatprep.subr.mxu0 0.0
    %1765 = vmatpush1.msra.mxu0 0.0
    %1766 = vmatprep.subr.mxu0 0.0
    %1767 = vmatpush1.msra.mxu0 0.0
    %1768 = vmatprep.subr.mxu0 0.0
    %1769 = vmatpush1.msra.mxu0 0.0
    %1770 = vmatprep.subr.mxu0 0.0
    %1771 = vmatpush1.msra.mxu0 0.0
    %1772 = vmatprep.subr.mxu0 0.0
    %1773 = vmatpush1.msra.mxu0 0.0
    %1774 = vmatprep.subr.mxu0 0.0
    %1775 = vmatpush1.msra.mxu0 0.0
    %1776 = vmatprep.subr.mxu0 0.0
    %1777 = vmatpush1.msra.mxu0 0.0
    %1778 = vmatprep.subr.mxu0 0.0
    %1779 = vmatpush1.msra.mxu0 0.0
    %1780 = vmatprep.subr.mxu0 0.0
    %1781 = vmatpush1.msra.mxu0 0.0
    %1782 = vmatprep.mubr.f32.mxu0 0.0
    %v1783 = vand.u32 %v1617, 4294901760
    %1784 = vmatmul.mubr.f32.gmra.mrb[0].mxu0 %v1783
    %v1785 = vpop.f32.mrb[0].mxu0
    %v1786 = vadd.f32 %v1695, %v1785
    %v1787 = vpop.f32.mrb[0].mxu0
    %1788 = vdwg.mxu0
    %1789 = vmatprep.subr.mxu0 0.0
    %v1790 = vand.u32 %v1601, 4294901760
    %v1791 = vsub.f32 %v1601, %v1790
    %1792 = vmatpush1.msra.mxu0 %v1791
    %1793 = vmatprep.subr.mxu0 0.0
    %v1794 = vand.u32 %v1603, 4294901760
    %v1795 = vsub.f32 %v1603, %v1794
    %1796 = vmatpush1.msra.mxu0 %v1795
    %1797 = vmatprep.subr.mxu0 0.0
    %v1798 = vand.u32 %v1605, 4294901760
    %v1799 = vsub.f32 %v1605, %v1798
    %1800 = vmatpush1.msra.mxu0 %v1799
    %1801 = vmatprep.subr.mxu0 0.0
    %v1802 = vand.u32 %v1607, 4294901760
    %v1803 = vsub.f32 %v1607, %v1802
    %1804 = vmatpush1.msra.mxu0 %v1803
    %1805 = vmatprep.subr.mxu0 0.0
    %1806 = vmatpush1.msra.mxu0 0.0
    %1807 = vmatprep.subr.mxu0 0.0
    %1808 = vmatpush1.msra.mxu0 0.0
    %1809 = vmatprep.subr.mxu0 0.0
    %1810 = vmatpush1.msra.mxu0 0.0
    %1811 = vmatprep.subr.mxu0 0.0
    %1812 = vmatpush1.msra.mxu0 0.0
    %1813 = vmatprep.subr.mxu0 0.0
    %1814 = vmatpush1.msra.mxu0 0.0
    %1815 = vmatprep.subr.mxu0 0.0
    %1816 = vmatpush1.msra.mxu0 0.0
    %1817 = vmatprep.subr.mxu0 0.0
    %1818 = vmatpush1.msra.mxu0 0.0
    %1819 = vmatprep.subr.mxu0 0.0
    %1820 = vmatpush1.msra.mxu0 0.0
    %1821 = vmatprep.subr.mxu0 0.0
    %1822 = vmatpush1.msra.mxu0 0.0
    %1823 = vmatprep.subr.mxu0 0.0
    %1824 = vmatpush1.msra.mxu0 0.0
    %1825 = vmatprep.subr.mxu0 0.0
    %1826 = vmatpush1.msra.mxu0 0.0
    %1827 = vmatprep.subr.mxu0 0.0
    %1828 = vmatpush1.msra.mxu0 0.0
    %1829 = vmatprep.subr.mxu0 0.0
    %1830 = vmatpush1.msra.mxu0 0.0
    %1831 = vmatprep.subr.mxu0 0.0
    %1832 = vmatpush1.msra.mxu0 0.0
    %1833 = vmatprep.subr.mxu0 0.0
    %1834 = vmatpush1.msra.mxu0 0.0
    %1835 = vmatprep.subr.mxu0 0.0
    %1836 = vmatpush1.msra.mxu0 0.0
    %1837 = vmatprep.subr.mxu0 0.0
    %1838 = vmatpush1.msra.mxu0 0.0
    %1839 = vmatprep.subr.mxu0 0.0
    %1840 = vmatpush1.msra.mxu0 0.0
    %1841 = vmatprep.subr.mxu0 0.0
    %1842 = vmatpush1.msra.mxu0 0.0
    %1843 = vmatprep.subr.mxu0 0.0
    %1844 = vmatpush1.msra.mxu0 0.0
    %1845 = vmatprep.subr.mxu0 0.0
    %1846 = vmatpush1.msra.mxu0 0.0
    %1847 = vmatprep.subr.mxu0 0.0
    %1848 = vmatpush1.msra.mxu0 0.0
    %1849 = vmatprep.subr.mxu0 0.0
    %1850 = vmatpush1.msra.mxu0 0.0
    %1851 = vmatprep.subr.mxu0 0.0
    %1852 = vmatpush1.msra.mxu0 0.0
    %1853 = vmatprep.subr.mxu0 0.0
    %1854 = vmatpush1.msra.mxu0 0.0
    %1855 = vmatprep.subr.mxu0 0.0
    %1856 = vmatpush1.msra.mxu0 0.0
    %1857 = vmatprep.subr.mxu0 0.0
    %1858 = vmatpush1.msra.mxu0 0.0
    %1859 = vmatprep.subr.mxu0 0.0
    %1860 = vmatpush1.msra.mxu0 0.0
    %1861 = vmatprep.mubr.f32.mxu0 0.0
    %v1862 = vand.u32 %v1617, 4294901760
    %v1863 = vsub.f32 %v1617, %v1862
    %1864 = vmatmul.mubr.f32.gmra.mrb[0].mxu0 %v1863
    %v1865 = vpop.f32.mrb[0].mxu0
    %v1866 = vadd.f32 %v1786, %v1865
    %v1867 = vpop.f32.mrb[0].mxu0
    %1868 = vdwg.mxu0
    %1869 = vmatprep.subr.mxu0 0.0
    %v1870 = vand.u32 %v1601, 4294901760
    %1871 = vmatpush1.msra.mxu0 %v1870
    %1872 = vmatprep.subr.mxu0 0.0
    %v1873 = vand.u32 %v1603, 4294901760
    %1874 = vmatpush1.msra.mxu0 %v1873
    %1875 = vmatprep.subr.mxu0 0.0
    %v1876 = vand.u32 %v1605, 4294901760
    %1877 = vmatpush1.msra.mxu0 %v1876
    %1878 = vmatprep.subr.mxu0 0.0
    %v1879 = vand.u32 %v1607, 4294901760
    %1880 = vmatpush1.msra.mxu0 %v1879
    %1881 = vmatprep.subr.mxu0 0.0
    %1882 = vmatpush1.msra.mxu0 0.0
    %1883 = vmatprep.subr.mxu0 0.0
    %1884 = vmatpush1.msra.mxu0 0.0
    %1885 = vmatprep.subr.mxu0 0.0
    %1886 = vmatpush1.msra.mxu0 0.0
    %1887 = vmatprep.subr.mxu0 0.0
    %1888 = vmatpush1.msra.mxu0 0.0
    %1889 = vmatprep.subr.mxu0 0.0
    %1890 = vmatpush1.msra.mxu0 0.0
    %1891 = vmatprep.subr.mxu0 0.0
    %1892 = vmatpush1.msra.mxu0 0.0
    %1893 = vmatprep.subr.mxu0 0.0
    %1894 = vmatpush1.msra.mxu0 0.0
    %1895 = vmatprep.subr.mxu0 0.0
    %1896 = vmatpush1.msra.mxu0 0.0
    %1897 = vmatprep.subr.mxu0 0.0
    %1898 = vmatpush1.msra.mxu0 0.0
    %1899 = vmatprep.subr.mxu0 0.0
    %1900 = vmatpush1.msra.mxu0 0.0
    %1901 = vmatprep.subr.mxu0 0.0
    %1902 = vmatpush1.msra.mxu0 0.0
    %1903 = vmatprep.subr.mxu0 0.0
    %1904 = vmatpush1.msra.mxu0 0.0
    %1905 = vmatprep.subr.mxu0 0.0
    %1906 = vmatpush1.msra.mxu0 0.0
    %1907 = vmatprep.subr.mxu0 0.0
    %1908 = vmatpush1.msra.mxu0 0.0
    %1909 = vmatprep.subr.mxu0 0.0
    %1910 = vmatpush1.msra.mxu0 0.0
    %1911 = vmatprep.subr.mxu0 0.0
    %1912 = vmatpush1.msra.mxu0 0.0
    %1913 = vmatprep.subr.mxu0 0.0
    %1914 = vmatpush1.msra.mxu0 0.0
    %1915 = vmatprep.subr.mxu0 0.0
    %1916 = vmatpush1.msra.mxu0 0.0
    %1917 = vmatprep.subr.mxu0 0.0
    %1918 = vmatpush1.msra.mxu0 0.0
    %1919 = vmatprep.subr.mxu0 0.0
    %1920 = vmatpush1.msra.mxu0 0.0
    %1921 = vmatprep.subr.mxu0 0.0
    %1922 = vmatpush1.msra.mxu0 0.0
    %1923 = vmatprep.subr.mxu0 0.0
    %1924 = vmatpush1.msra.mxu0 0.0
    %1925 = vmatprep.subr.mxu0 0.0
    %1926 = vmatpush1.msra.mxu0 0.0
    %1927 = vmatprep.subr.mxu0 0.0
    %1928 = vmatpush1.msra.mxu0 0.0
    %1929 = vmatprep.subr.mxu0 0.0
    %1930 = vmatpush1.msra.mxu0 0.0
    %1931 = vmatprep.subr.mxu0 0.0
    %1932 = vmatpush1.msra.mxu0 0.0
    %1933 = vmatprep.subr.mxu0 0.0
    %1934 = vmatpush1.msra.mxu0 0.0
    %1935 = vmatprep.subr.mxu0 0.0
    %1936 = vmatpush1.msra.mxu0 0.0
    %1937 = vmatprep.mubr.f32.mxu0 0.0
    %v1938 = vand.u32 %v1617, 4294901760
    %v1939 = vsub.f32 %v1617, %v1938
    %v1940 = vand.u32 %v1939, 4294901760
    %1941 = vmatmul.mubr.f32.gmra.mrb[0].mxu0 %v1940
    %v1942 = vpop.f32.mrb[0].mxu0
    %v1943 = vadd.f32 %v1866, %v1942
    %v1944 = vpop.f32.mrb[0].mxu0
    %1945 = vdwg.mxu0
    %1946 = vmatprep.subr.mxu0 0.0
    %v1947 = vand.u32 %v1601, 4294901760
    %v1948 = vsub.f32 %v1601, %v1947
    %v1949 = vand.u32 %v1948, 4294901760
    %1950 = vmatpush1.msra.mxu0 %v1949
    %1951 = vmatprep.subr.mxu0 0.0
    %v1952 = vand.u32 %v1603, 4294901760
    %v1953 = vsub.f32 %v1603, %v1952
    %v1954 = vand.u32 %v1953, 4294901760
    %1955 = vmatpush1.msra.mxu0 %v1954
    %1956 = vmatprep.subr.mxu0 0.0
    %v1957 = vand.u32 %v1605, 4294901760
    %v1958 = vsub.f32 %v1605, %v1957
    %v1959 = vand.u32 %v1958, 4294901760
    %1960 = vmatpush1.msra.mxu0 %v1959
    %1961 = vmatprep.subr.mxu0 0.0
    %v1962 = vand.u32 %v1607, 4294901760
    %v1963 = vsub.f32 %v1607, %v1962
    %v1964 = vand.u32 %v1963, 4294901760
    %1965 = vmatpush1.msra.mxu0 %v1964
    %1966 = vmatprep.subr.mxu0 0.0
    %1967 = vmatpush1.msra.mxu0 0.0
    %1968 = vmatprep.subr.mxu0 0.0
    %1969 = vmatpush1.msra.mxu0 0.0
    %1970 = vmatprep.subr.mxu0 0.0
    %1971 = vmatpush1.msra.mxu0 0.0
    %1972 = vmatprep.subr.mxu0 0.0
    %1973 = vmatpush1.msra.mxu0 0.0
    %1974 = vmatprep.subr.mxu0 0.0
    %1975 = vmatpush1.msra.mxu0 0.0
    %1976 = vmatprep.subr.mxu0 0.0
    %1977 = vmatpush1.msra.mxu0 0.0
    %1978 = vmatprep.subr.mxu0 0.0
    %1979 = vmatpush1.msra.mxu0 0.0
    %1980 = vmatprep.subr.mxu0 0.0
    %1981 = vmatpush1.msra.mxu0 0.0
    %1982 = vmatprep.subr.mxu0 0.0
    %1983 = vmatpush1.msra.mxu0 0.0
    %1984 = vmatprep.subr.mxu0 0.0
    %1985 = vmatpush1.msra.mxu0 0.0
    %1986 = vmatprep.subr.mxu0 0.0
    %1987 = vmatpush1.msra.mxu0 0.0
    %1988 = vmatprep.subr.mxu0 0.0
    %1989 = vmatpush1.msra.mxu0 0.0
    %1990 = vmatprep.subr.mxu0 0.0
    %1991 = vmatpush1.msra.mxu0 0.0
    %1992 = vmatprep.subr.mxu0 0.0
    %1993 = vmatpush1.msra.mxu0 0.0
    %1994 = vmatprep.subr.mxu0 0.0
    %1995 = vmatpush1.msra.mxu0 0.0
    %1996 = vmatprep.subr.mxu0 0.0
    %1997 = vmatpush1.msra.mxu0 0.0
    %1998 = vmatprep.subr.mxu0 0.0
    %1999 = vmatpush1.msra.mxu0 0.0
    %2000 = vmatprep.subr.mxu0 0.0
    %2001 = vmatpush1.msra.mxu0 0.0
    %2002 = vmatprep.subr.mxu0 0.0
    %2003 = vmatpush1.msra.mxu0 0.0
    %2004 = vmatprep.subr.mxu0 0.0
    %2005 = vmatpush1.msra.mxu0 0.0
    %2006 = vmatprep.subr.mxu0 0.0
    %2007 = vmatpush1.msra.mxu0 0.0
    %2008 = vmatprep.subr.mxu0 0.0
    %2009 = vmatpush1.msra.mxu0 0.0
    %2010 = vmatprep.subr.mxu0 0.0
    %2011 = vmatpush1.msra.mxu0 0.0
    %2012 = vmatprep.subr.mxu0 0.0
    %2013 = vmatpush1.msra.mxu0 0.0
    %2014 = vmatprep.subr.mxu0 0.0
    %2015 = vmatpush1.msra.mxu0 0.0
    %2016 = vmatprep.subr.mxu0 0.0
    %2017 = vmatpush1.msra.mxu0 0.0
    %2018 = vmatprep.subr.mxu0 0.0
    %2019 = vmatpush1.msra.mxu0 0.0
    %2020 = vmatprep.subr.mxu0 0.0
    %2021 = vmatpush1.msra.mxu0 0.0
    %2022 = vmatprep.mubr.f32.mxu0 0.0
    %v2023 = vand.u32 %v1617, 4294901760
    %2024 = vmatmul.mubr.f32.gmra.mrb[0].mxu0 %v2023
    %v2025 = vpop.f32.mrb[0].mxu0
    %v2026 = vadd.f32 %v1943, %v2025
    %v2027 = vpop.f32.mrb[0].mxu0
    %2028 = vdwg.mxu0
    %2029 = vmatprep.subr.mxu0 0.0
    %v2030 = vand.u32 %v1601, 4294901760
    %2031 = vmatpush1.msra.mxu0 %v2030
    %2032 = vmatprep.subr.mxu0 0.0
    %v2033 = vand.u32 %v1603, 4294901760
    %2034 = vmatpush1.msra.mxu0 %v2033
    %2035 = vmatprep.subr.mxu0 0.0
    %v2036 = vand.u32 %v1605, 4294901760
    %2037 = vmatpush1.msra.mxu0 %v2036
    %2038 = vmatprep.subr.mxu0 0.0
    %v2039 = vand.u32 %v1607, 4294901760
    %2040 = vmatpush1.msra.mxu0 %v2039
    %2041 = vmatprep.subr.mxu0 0.0
    %2042 = vmatpush1.msra.mxu0 0.0
    %2043 = vmatprep.subr.mxu0 0.0
    %2044 = vmatpush1.msra.mxu0 0.0
    %2045 = vmatprep.subr.mxu0 0.0
    %2046 = vmatpush1.msra.mxu0 0.0
    %2047 = vmatprep.subr.mxu0 0.0
    %2048 = vmatpush1.msra.mxu0 0.0
    %2049 = vmatprep.subr.mxu0 0.0
    %2050 = vmatpush1.msra.mxu0 0.0
    %2051 = vmatprep.subr.mxu0 0.0
    %2052 = vmatpush1.msra.mxu0 0.0
    %2053 = vmatprep.subr.mxu0 0.0
    %2054 = vmatpush1.msra.mxu0 0.0
    %2055 = vmatprep.subr.mxu0 0.0
    %2056 = vmatpush1.msra.mxu0 0.0
    %2057 = vmatprep.subr.mxu0 0.0
    %2058 = vmatpush1.msra.mxu0 0.0
    %2059 = vmatprep.subr.mxu0 0.0
    %2060 = vmatpush1.msra.mxu0 0.0
    %2061 = vmatprep.subr.mxu0 0.0
    %2062 = vmatpush1.msra.mxu0 0.0
    %2063 = vmatprep.subr.mxu0 0.0
    %2064 = vmatpush1.msra.mxu0 0.0
    %2065 = vmatprep.subr.mxu0 0.0
    %2066 = vmatpush1.msra.mxu0 0.0
    %2067 = vmatprep.subr.mxu0 0.0
    %2068 = vmatpush1.msra.mxu0 0.0
    %2069 = vmatprep.subr.mxu0 0.0
    %2070 = vmatpush1.msra.mxu0 0.0
    %2071 = vmatprep.subr.mxu0 0.0
    %2072 = vmatpush1.msra.mxu0 0.0
    %2073 = vmatprep.subr.mxu0 0.0
    %2074 = vmatpush1.msra.mxu0 0.0
    %2075 = vmatprep.subr.mxu0 0.0
    %2076 = vmatpush1.msra.mxu0 0.0
    %2077 = vmatprep.subr.mxu0 0.0
    %2078 = vmatpush1.msra.mxu0 0.0
    %2079 = vmatprep.subr.mxu0 0.0
    %2080 = vmatpush1.msra.mxu0 0.0
    %2081 = vmatprep.subr.mxu0 0.0
    %2082 = vmatpush1.msra.mxu0 0.0
    %2083 = vmatprep.subr.mxu0 0.0
    %2084 = vmatpush1.msra.mxu0 0.0
    %2085 = vmatprep.subr.mxu0 0.0
    %2086 = vmatpush1.msra.mxu0 0.0
    %2087 = vmatprep.subr.mxu0 0.0
    %2088 = vmatpush1.msra.mxu0 0.0
    %2089 = vmatprep.subr.mxu0 0.0
    %2090 = vmatpush1.msra.mxu0 0.0
    %2091 = vmatprep.subr.mxu0 0.0
    %2092 = vmatpush1.msra.mxu0 0.0
    %2093 = vmatprep.subr.mxu0 0.0
    %2094 = vmatpush1.msra.mxu0 0.0
    %2095 = vmatprep.subr.mxu0 0.0
    %2096 = vmatpush1.msra.mxu0 0.0
    %2097 = vmatprep.mubr.f32.mxu0 0.0
    %v2098 = vand.u32 %v1617, 4294901760
    %2099 = vmatmul.mubr.f32.gmra.mrb[0].mxu0 %v2098
    %v2100 = vpop.f32.mrb[0].mxu0
    %v2101 = vadd.f32 %v2026, %v2100
    %v2102 = vpop.f32.mrb[0].mxu0
    %2103 = vdwg.mxu0
    %2104 = vst.msk [vmem:[%s2] sm:$0xff] %vm521, %v2101
    // Predicated region
    $region14: #{discriminator_forward_batched.1} parent=1 // pred_check
      _
    $region15: #{discriminator_forward_batched.1} parent=1 // pred_check_branch
      %2106 = sbr.rel (0) target = $region17
    $region16: #{discriminator_forward_batched.1} parent=1 // pred_region
      _
    $region17: #{discriminator_forward_batched.1} parent=1 // pred_fallthru
      _
    // Predicated region
    $region18: #{discriminator_forward_batched.1} parent=1 // pred_check
      _
    $region19: #{discriminator_forward_batched.1} parent=1 // pred_check_branch
      %2108 = sbr.rel (0) target = $region21
    $region20: #{discriminator_forward_batched.1} parent=1 // pred_region
      _
    $region21: #{discriminator_forward_batched.1} parent=1 // pred_fallthru
      _
    %2109 = vsyncpa [#allocation3], 1

</llo_original>
